<compile_context>
chip_gen: v5e
topology: v5e:2x2
jax: 0.10.0
libtpu: 0.0.40
codegen_flags: <defaults>
</compile_context>

<pallas_src>
import jax
import jax.numpy as jnp
import numpy as np
from jax.experimental import pallas as pl
from jax.experimental.pallas import tpu as pltpu  # noqa: F401  (TPU backend)

# ----------------------------- small config ---------------------------------
VOCAB = 256
HIDDEN = 32
N_HEADS = 4
HEAD_DIM = HIDDEN // N_HEADS
INTERMEDIATE = 64
N_LAYERS = 2
MAX_POS = 16
LN_EPS = 1e-5
INIT_RANGE = 0.02

BATCH = 2
SEQ = 8
PARAMS_PER_LAYER = 10  # ln1g, ln1b, wqkv, wo, ln2g, ln2b, w1, b1, w2, b2


# ----------------------------- shared math ----------------------------------
def _layernorm(x, g, b, eps=LN_EPS):
    mu = jnp.mean(x, axis=-1, keepdims=True)
    var = jnp.mean((x - mu) ** 2, axis=-1, keepdims=True)
    return (x - mu) * jax.lax.rsqrt(var + eps) * g + b


# ----------------------------- fused Pallas kernel ---------------------------
def msingi_fused_kernel(x_ref, cos_ref, sin_ref, bmask_ref, hmask_ref, *refs):
    """Both MsingiBlocks + final LayerNorm + tied lm_head, all tokens at once.

    x_ref:      (B*S, H)      embedded tokens
    cos_ref:    (B*S, H)      rotary cos table (tiled over batch)
    sin_ref:    (B*S, H)      rotary sin table (tiled over batch)
    bmask_ref:  (B*S, B*S)    block-diagonal additive mask (0 in-batch, -1e9 off)
    hmask_ref:  (NH, H)       per-head column masks (1.0 on that head's dims)
    refs[:-1]:  per-layer params (10 each) + [lnfg, lnfb, emb_T]
    refs[-1]:   (B*S, VOCAB)  output logits
    """
    out_ref = refs[-1]
    prefs = refs[:-1]

    H = HIDDEN
    x = x_ref[...]
    cos = cos_ref[...]
    sin = sin_ref[...]
    bmask = bmask_ref[...]
    HM = hmask_ref[...]
    scale = HEAD_DIM ** (-0.5)

    idx = 0
    for _ in range(N_LAYERS):          # static unroll over layers
        ln1g = prefs[idx + 0][...]
        ln1b = prefs[idx + 1][...]
        wqkv = prefs[idx + 2][...]     # (H, 5H) = [wq | wk | wv | wq@P | wk@P]
        wo = prefs[idx + 3][...]
        ln2g = prefs[idx + 4][...]
        ln2b = prefs[idx + 5][...]
        w1 = prefs[idx + 6][...]
        b1 = prefs[idx + 7][...]
        w2 = prefs[idx + 8][...]
        b2 = prefs[idx + 9][...]
        idx += PARAMS_PER_LAYER

        # ---- attention branch ------------------------------------------------
        xn = _layernorm(x, ln1g, ln1b)
        proj = jnp.dot(xn, wqkv, preferred_element_type=jnp.float32)   # (BS, 5H)

        # rotary embedding: pair-swap was folded into wq@P / wk@P at init, so
        # this is pure element-wise work on the VPU.
        q = proj[:, 0 * H:1 * H] * cos + proj[:, 3 * H:4 * H] * sin
        k = proj[:, 1 * H:2 * H] * cos + proj[:, 4 * H:5 * H] * sin
        v = proj[:, 2 * H:3 * H]

        attn = jnp.zeros_like(x)
        for h in range(N_HEADS):       # static unroll over heads
            mh = HM[h:h + 1, :]        # (1, H) head-column mask
            qh = q * mh                # zero out other heads' columns
            vh = v * mh
            # (q_h . k_h) over head-h dims only; block-diag mask keeps the
            # softmax strictly within each batch row.
            s = jax.lax.dot_general(qh, k, (((1,), (1,)), ((), ())),
                                    preferred_element_type=jnp.float32)
            s = s * scale + bmask
            s = s - jnp.max(s, axis=-1, keepdims=True)
            p = jnp.exp(s)
            p = p / jnp.sum(p, axis=-1, keepdims=True)
            attn = attn + jnp.dot(p, vh, preferred_element_type=jnp.float32)

        x = x + jnp.dot(attn, wo, preferred_element_type=jnp.float32)

        # ---- MLP branch --------------------------------------------------------
        hn = _layernorm(x, ln2g, ln2b)
        a = jnp.dot(hn, w1, preferred_element_type=jnp.float32) + b1
        g = jax.nn.gelu(a, approximate=True)                    # GELU(tanh)
        x = x + jnp.dot(g, w2, preferred_element_type=jnp.float32) + b2

    # ---- final LayerNorm + tied lm_head ---------------------------------------
    lnfg = prefs[idx + 0][...]
    lnfb = prefs[idx + 1][...]
    emb_t = prefs[idx + 2][...]                                 # (H, VOCAB)
    xn = _layernorm(x, lnfg, lnfb)
    out_ref[...] = jnp.dot(xn, emb_t, preferred_element_type=jnp.float32)


# ----------------------------- wrapper ---------------------------------------
def _flat_kernel_params(params, consts):
    flat = [consts["cos"], consts["sin"], consts["bmask"], consts["hmask"]]
    for lp in params["layers"]:
        flat += [lp["ln1g"], lp["ln1b"], lp["wqkv"], lp["wo"],
                 lp["ln2g"], lp["ln2b"], lp["w1"], lp["b1"], lp["w2"], lp["b2"]]
    flat += [params["lnfg"], params["lnfb"], params["emb_t"]]
    return flat


@jax.jit
def msingi1_forward(input_ids, params, consts):
    B, S = input_ids.shape
    x = params["emb"][input_ids].reshape(B * S, HIDDEN)   # embedding gather (glue)
    args = [x] + _flat_kernel_params(params, consts)
    logits = pl.pallas_call(
        msingi_fused_kernel,
        out_shape=jax.ShapeDtypeStruct((B * S, VOCAB), jnp.float32),
        # no grid: whole working set (~60 KB) sits in VMEM in a single step;
        # lane-dense (16, 256) output -> unmasked vector stores.
    )(*args)
    return logits.reshape(B, S, VOCAB)


# ----------------------------- constants & parameter init --------------------
def make_rotary_tables(seq_len):
    # matches precompute_freqs_cis(head_dim, max_pos)[:seq_len]
    inv_freq = 1.0 / (10000.0 ** (jnp.arange(0, HEAD_DIM, 2, dtype=jnp.float32) / HEAD_DIM))
    t = jnp.arange(seq_len, dtype=jnp.float32)
    ang = jnp.outer(t, inv_freq)                             # (S, HEAD_DIM//2)
    cos_h, sin_h = jnp.cos(ang), jnp.sin(ang)
    # expand to (S, HIDDEN): repeat each pair entry twice, tile across heads
    cos_full = jnp.tile(jnp.repeat(cos_h, 2, axis=-1), (1, N_HEADS))
    sin_full = jnp.tile(jnp.repeat(sin_h, 2, axis=-1), (1, N_HEADS))
    # pair-swap/negate permutation:  (x @ P)[2i] = -x[2i+1], (x @ P)[2i+1] = x[2i]
    P = jnp.zeros((HIDDEN, HIDDEN), jnp.float32)
    P = P.at[jnp.arange(0, HIDDEN, 2), jnp.arange(1, HIDDEN, 2)].set(1.0)
    P = P.at[jnp.arange(1, HIDDEN, 2), jnp.arange(0, HIDDEN, 2)].set(-1.0)
    return cos_full, sin_full, P, cos_h, sin_h


def make_constants(batch, seq_len):
    cos_full, sin_full, P, cos_h, sin_h = make_rotary_tables(seq_len)
    # rotary tables tiled to (B*S, H) so the kernel uses plain elementwise mul
    cos_t = jnp.tile(cos_full, (batch, 1))
    sin_t = jnp.tile(sin_full, (batch, 1))
    # block-diagonal additive mask: tokens only attend within their own batch row
    tok_batch = jnp.repeat(jnp.arange(batch), seq_len)
    bmask = jnp.where(tok_batch[:, None] == tok_batch[None, :], 0.0, -1e9
                      ).astype(jnp.float32)
    # per-head column masks (1.0 on that head's hidden dims)
    d_head = jnp.arange(HIDDEN) // HEAD_DIM
    hmask = (d_head[None, :] == jnp.arange(N_HEADS)[:, None]).astype(jnp.float32)
    consts = {"cos": cos_t, "sin": sin_t, "bmask": bmask, "hmask": hmask}
    return consts, P, cos_h, sin_h


def init_params(key, P):
    def normal(k, shape):
        return INIT_RANGE * jax.random.normal(k, shape, dtype=jnp.float32)

    keys = jax.random.split(key, 1 + 6 * N_LAYERS)
    emb = normal(keys[0], (VOCAB, HIDDEN))
    params = {"emb": emb,
              "emb_t": emb.T,                          # tied lm_head, transposed once
              "lnfg": jnp.ones((1, HIDDEN), jnp.float32),
              "lnfb": jnp.zeros((1, HIDDEN), jnp.float32),
              "layers": []}
    ki = 1
    for _ in range(N_LAYERS):
        wq = normal(keys[ki + 0], (HIDDEN, HIDDEN))
        wk = normal(keys[ki + 1], (HIDDEN, HIDDEN))
        wv = normal(keys[ki + 2], (HIDDEN, HIDDEN))
        wo = normal(keys[ki + 3], (HIDDEN, HIDDEN))
        w1 = normal(keys[ki + 4], (HIDDEN, INTERMEDIATE))
        w2 = normal(keys[ki + 5], (INTERMEDIATE, HIDDEN))
        lp = {
            "wq": wq, "wk": wk, "wv": wv, "wo": wo,
            # fused projection with rotary pair-swap folded in: [q | k | v | qP | kP]
            "wqkv": jnp.concatenate([wq, wk, wv, wq @ P, wk @ P], axis=1),
            "w1": w1, "b1": jnp.zeros((1, INTERMEDIATE), jnp.float32),
            "w2": w2, "b2": jnp.zeros((1, HIDDEN), jnp.float32),
            "ln1g": jnp.ones((1, HIDDEN), jnp.float32),
            "ln1b": jnp.zeros((1, HIDDEN), jnp.float32),
            "ln2g": jnp.ones((1, HIDDEN), jnp.float32),
            "ln2b": jnp.zeros((1, HIDDEN), jnp.float32),
        }
        params["layers"].append(lp)
        ki += 6
    return params


# ----------------------------- pure-JAX reference ----------------------------
def ref_forward(input_ids, params, cos_h, sin_h):
    x = params["emb"][input_ids]
    B, S, H = x.shape
    scale = HEAD_DIM ** (-0.5)

    def rotary(t):
        th = t.reshape(B, S, N_HEADS, HEAD_DIM // 2, 2)
        te, to = th[..., 0], th[..., 1]
        c = cos_h[None, :, None, :]
        s = sin_h[None, :, None, :]
        re = te * c - to * s
        im = te * s + to * c
        return jnp.stack([re, im], axis=-1).reshape(B, S, H)

    for lp in params["layers"]:
        xn = _layernorm(x, lp["ln1g"], lp["ln1b"])
        q, k, v = xn @ lp["wq"], xn @ lp["wk"], xn @ lp["wv"]
        q, k = rotary(q), rotary(k)
        qh = q.reshape(B, S, N_HEADS, HEAD_DIM).transpose(0, 2, 1, 3)
        kh = k.reshape(B, S, N_HEADS, HEAD_DIM).transpose(0, 2, 1, 3)
        vh = v.reshape(B, S, N_HEADS, HEAD_DIM).transpose(0, 2, 1, 3)
        s = jnp.einsum("bhqd,bhkd->bhqk", qh, kh) * scale
        p = jax.nn.softmax(s, axis=-1)
        o = jnp.einsum("bhqk,bhkd->bhqd", p, vh).transpose(0, 2, 1, 3).reshape(B, S, H)
        x = x + o @ lp["wo"]
        hn = _layernorm(x, lp["ln2g"], lp["ln2b"])
        m = jax.nn.gelu(hn @ lp["w1"] + lp["b1"], approximate=True) @ lp["w2"] + lp["b2"]
        x = x + m
    xn = _layernorm(x, params["lnfg"], params["lnfb"])
    return xn @ params["emb"].T


# ----------------------------- main ------------------------------------------
if __name__ == "__main__":
    key = jax.random.PRNGKey(0)
    pkey, dkey = jax.random.split(key)

    consts, P, cos_h, sin_h = make_constants(BATCH, SEQ)
    params = init_params(pkey, P)

    input_ids = jax.random.randint(dkey, (BATCH, SEQ), 0, VOCAB, dtype=jnp.int32)

    logits = msingi1_forward(input_ids, params, consts)
    logits = jax.block_until_ready(logits)

    ref = jax.block_until_ready(ref_forward(input_ids, params, cos_h, sin_h))

    assert logits.shape == (BATCH, SEQ, VOCAB)
    np.testing.assert_allclose(np.asarray(logits), np.asarray(ref), atol=1e-2, rtol=1e-2)
    print("KERNEL_OK")
</pallas_src>

<mosaic_0001>
module attributes {stable_mosaic.version = 11 : i64} {
  func.func @msingi_fused_kernel(%arg0: memref<16x32xf32, #tpu.memory_space<vmem>>, %arg1: memref<16x32xf32, #tpu.memory_space<vmem>>, %arg2: memref<16x32xf32, #tpu.memory_space<vmem>>, %arg3: memref<16x16xf32, #tpu.memory_space<vmem>>, %arg4: memref<4x32xf32, #tpu.memory_space<vmem>>, %arg5: memref<1x32xf32, #tpu.memory_space<vmem>>, %arg6: memref<1x32xf32, #tpu.memory_space<vmem>>, %arg7: memref<32x160xf32, #tpu.memory_space<vmem>>, %arg8: memref<32x32xf32, #tpu.memory_space<vmem>>, %arg9: memref<1x32xf32, #tpu.memory_space<vmem>>, %arg10: memref<1x32xf32, #tpu.memory_space<vmem>>, %arg11: memref<32x64xf32, #tpu.memory_space<vmem>>, %arg12: memref<1x64xf32, #tpu.memory_space<vmem>>, %arg13: memref<64x32xf32, #tpu.memory_space<vmem>>, %arg14: memref<1x32xf32, #tpu.memory_space<vmem>>, %arg15: memref<1x32xf32, #tpu.memory_space<vmem>>, %arg16: memref<1x32xf32, #tpu.memory_space<vmem>>, %arg17: memref<32x160xf32, #tpu.memory_space<vmem>>, %arg18: memref<32x32xf32, #tpu.memory_space<vmem>>, %arg19: memref<1x32xf32, #tpu.memory_space<vmem>>, %arg20: memref<1x32xf32, #tpu.memory_space<vmem>>, %arg21: memref<32x64xf32, #tpu.memory_space<vmem>>, %arg22: memref<1x64xf32, #tpu.memory_space<vmem>>, %arg23: memref<64x32xf32, #tpu.memory_space<vmem>>, %arg24: memref<1x32xf32, #tpu.memory_space<vmem>>, %arg25: memref<1x32xf32, #tpu.memory_space<vmem>>, %arg26: memref<1x32xf32, #tpu.memory_space<vmem>>, %arg27: memref<32x256xf32, #tpu.memory_space<vmem>>, %arg28: memref<16x256xf32, #tpu.memory_space<vmem>>) attributes {dimension_semantics = [], scalar_prefetch = 0 : i64, scratch_operands = 0 : i64, tpu.core_type = #tpu.core_type<tc>} {
    %c0 = arith.constant 0 : index
    %c0_0 = arith.constant 0 : index
    %0 = vector.load %arg0[%c0, %c0_0] : memref<16x32xf32, #tpu.memory_space<vmem>>, vector<16x32xf32>
    %c0_1 = arith.constant 0 : index
    %c0_2 = arith.constant 0 : index
    %1 = vector.load %arg1[%c0_1, %c0_2] : memref<16x32xf32, #tpu.memory_space<vmem>>, vector<16x32xf32>
    %c0_3 = arith.constant 0 : index
    %c0_4 = arith.constant 0 : index
    %2 = vector.load %arg2[%c0_3, %c0_4] : memref<16x32xf32, #tpu.memory_space<vmem>>, vector<16x32xf32>
    %c0_5 = arith.constant 0 : index
    %c0_6 = arith.constant 0 : index
    %3 = vector.load %arg3[%c0_5, %c0_6] : memref<16x16xf32, #tpu.memory_space<vmem>>, vector<16x16xf32>
    %c0_7 = arith.constant 0 : index
    %c0_8 = arith.constant 0 : index
    %4 = vector.load %arg4[%c0_7, %c0_8] : memref<4x32xf32, #tpu.memory_space<vmem>>, vector<4x32xf32>
    %c0_9 = arith.constant 0 : index
    %c0_10 = arith.constant 0 : index
    %5 = vector.load %arg5[%c0_9, %c0_10] : memref<1x32xf32, #tpu.memory_space<vmem>>, vector<1x32xf32>
    %c0_11 = arith.constant 0 : index
    %c0_12 = arith.constant 0 : index
    %6 = vector.load %arg6[%c0_11, %c0_12] : memref<1x32xf32, #tpu.memory_space<vmem>>, vector<1x32xf32>
    %c0_13 = arith.constant 0 : index
    %c0_14 = arith.constant 0 : index
    %7 = vector.load %arg7[%c0_13, %c0_14] : memref<32x160xf32, #tpu.memory_space<vmem>>, vector<32x160xf32>
    %c0_15 = arith.constant 0 : index
    %c0_16 = arith.constant 0 : index
    %8 = vector.load %arg8[%c0_15, %c0_16] : memref<32x32xf32, #tpu.memory_space<vmem>>, vector<32x32xf32>
    %c0_17 = arith.constant 0 : index
    %c0_18 = arith.constant 0 : index
    %9 = vector.load %arg9[%c0_17, %c0_18] : memref<1x32xf32, #tpu.memory_space<vmem>>, vector<1x32xf32>
    %c0_19 = arith.constant 0 : index
    %c0_20 = arith.constant 0 : index
    %10 = vector.load %arg10[%c0_19, %c0_20] : memref<1x32xf32, #tpu.memory_space<vmem>>, vector<1x32xf32>
    %c0_21 = arith.constant 0 : index
    %c0_22 = arith.constant 0 : index
    %11 = vector.load %arg11[%c0_21, %c0_22] : memref<32x64xf32, #tpu.memory_space<vmem>>, vector<32x64xf32>
    %c0_23 = arith.constant 0 : index
    %c0_24 = arith.constant 0 : index
    %12 = vector.load %arg12[%c0_23, %c0_24] : memref<1x64xf32, #tpu.memory_space<vmem>>, vector<1x64xf32>
    %c0_25 = arith.constant 0 : index
    %c0_26 = arith.constant 0 : index
    %13 = vector.load %arg13[%c0_25, %c0_26] : memref<64x32xf32, #tpu.memory_space<vmem>>, vector<64x32xf32>
    %c0_27 = arith.constant 0 : index
    %c0_28 = arith.constant 0 : index
    %14 = vector.load %arg14[%c0_27, %c0_28] : memref<1x32xf32, #tpu.memory_space<vmem>>, vector<1x32xf32>
    %cst = arith.constant dense<0.000000e+00> : vector<16xf32>
    %15 = vector.multi_reduction <add>, %0, %cst [1] : vector<16x32xf32> to vector<16xf32>
    %16 = vector.shape_cast %15 : vector<16xf32> to vector<16x1xf32>
    %cst_29 = arith.constant 3.200000e+01 : f32
    %17 = vector.broadcast %cst_29 : f32 to vector<16x1xf32>
    %18 = arith.divf %16, %17 : vector<16x1xf32>
    %19 = vector.broadcast %18 : vector<16x1xf32> to vector<16x32xf32>
    %20 = arith.subf %0, %19 : vector<16x32xf32>
    %21 = arith.mulf %20, %20 : vector<16x32xf32>
    %cst_30 = arith.constant dense<0.000000e+00> : vector<16xf32>
    %22 = vector.multi_reduction <add>, %21, %cst_30 [1] : vector<16x32xf32> to vector<16xf32>
    %23 = vector.shape_cast %22 : vector<16xf32> to vector<16x1xf32>
    %cst_31 = arith.constant 3.200000e+01 : f32
    %24 = vector.broadcast %cst_31 : f32 to vector<16x1xf32>
    %25 = arith.divf %23, %24 : vector<16x1xf32>
    %26 = vector.broadcast %18 : vector<16x1xf32> to vector<16x32xf32>
    %27 = arith.subf %0, %26 : vector<16x32xf32>
    %cst_32 = arith.constant 9.99999974E-6 : f32
    %28 = vector.broadcast %cst_32 : f32 to vector<16x1xf32>
    %29 = arith.addf %25, %28 : vector<16x1xf32>
    %30 = math.rsqrt %29 : vector<16x1xf32>
    %31 = vector.broadcast %30 : vector<16x1xf32> to vector<16x32xf32>
    %32 = arith.mulf %27, %31 : vector<16x32xf32>
    %33 = vector.broadcast %5 : vector<1x32xf32> to vector<16x32xf32>
    %34 = arith.mulf %32, %33 : vector<16x32xf32>
    %35 = vector.broadcast %6 : vector<1x32xf32> to vector<16x32xf32>
    %36 = arith.addf %34, %35 : vector<16x32xf32>
    %cst_33 = arith.constant dense<0.000000e+00> : vector<16x160xf32>
    %37 = tpu.matmul %36, %7, %cst_33 {dimension_numbers = #tpu.dot_dimension_numbers<[1], [0], [0], [1], [0, 0, 1, 1], [], []>} : vector<16x32xf32>, vector<32x160xf32>, vector<16x160xf32> -> vector<16x160xf32>
    %38 = vector.extract_strided_slice %37 {offsets = [0, 0], sizes = [16, 32], strides = [1, 1]} : vector<16x160xf32> to vector<16x32xf32>
    %39 = arith.mulf %38, %1 : vector<16x32xf32>
    %40 = vector.extract_strided_slice %37 {offsets = [0, 96], sizes = [16, 32], strides = [1, 1]} : vector<16x160xf32> to vector<16x32xf32>
    %41 = arith.mulf %40, %2 : vector<16x32xf32>
    %42 = arith.addf %39, %41 : vector<16x32xf32>
    %43 = vector.extract_strided_slice %37 {offsets = [0, 32], sizes = [16, 32], strides = [1, 1]} : vector<16x160xf32> to vector<16x32xf32>
    %44 = arith.mulf %43, %1 : vector<16x32xf32>
    %45 = vector.extract_strided_slice %37 {offsets = [0, 128], sizes = [16, 32], strides = [1, 1]} : vector<16x160xf32> to vector<16x32xf32>
    %46 = arith.mulf %45, %2 : vector<16x32xf32>
    %47 = arith.addf %44, %46 : vector<16x32xf32>
    %48 = vector.extract_strided_slice %37 {offsets = [0, 64], sizes = [16, 32], strides = [1, 1]} : vector<16x160xf32> to vector<16x32xf32>
    %cst_34 = arith.constant 0.000000e+00 : f32
    %49 = vector.broadcast %cst_34 : f32 to vector<16x32xf32>
    %50 = vector.extract_strided_slice %4 {offsets = [0, 0], sizes = [1, 32], strides = [1, 1]} : vector<4x32xf32> to vector<1x32xf32>
    %51 = vector.broadcast %50 : vector<1x32xf32> to vector<16x32xf32>
    %52 = arith.mulf %42, %51 : vector<16x32xf32>
    %53 = vector.broadcast %50 : vector<1x32xf32> to vector<16x32xf32>
    %54 = arith.mulf %48, %53 : vector<16x32xf32>
    %cst_35 = arith.constant dense<0.000000e+00> : vector<16x16xf32>
    %55 = tpu.matmul %52, %47, %cst_35 {dimension_numbers = #tpu.dot_dimension_numbers<[1], [1], [0], [0], [0, 0, 1, 0], [], []>} : vector<16x32xf32>, vector<16x32xf32>, vector<16x16xf32> -> vector<16x16xf32>
    %cst_36 = arith.constant 0.353553385 : f32
    %56 = vector.broadcast %cst_36 : f32 to vector<16x16xf32>
    %57 = arith.mulf %55, %56 : vector<16x16xf32>
    %58 = arith.addf %57, %3 : vector<16x16xf32>
    %cst_37 = arith.constant dense<0xFF800000> : vector<16xf32>
    %59 = vector.multi_reduction <maximumf>, %58, %cst_37 [1] : vector<16x16xf32> to vector<16xf32>
    %60 = vector.shape_cast %59 : vector<16xf32> to vector<16x1xf32>
    %61 = vector.broadcast %60 : vector<16x1xf32> to vector<16x16xf32>
    %62 = arith.subf %58, %61 : vector<16x16xf32>
    %63 = math.exp %62 : vector<16x16xf32>
    %cst_38 = arith.constant dense<0.000000e+00> : vector<16xf32>
    %64 = vector.multi_reduction <add>, %63, %cst_38 [1] : vector<16x16xf32> to vector<16xf32>
    %65 = vector.shape_cast %64 : vector<16xf32> to vector<16x1xf32>
    %66 = vector.broadcast %65 : vector<16x1xf32> to vector<16x16xf32>
    %67 = arith.divf %63, %66 : vector<16x16xf32>
    %cst_39 = arith.constant dense<0.000000e+00> : vector<16x32xf32>
    %68 = tpu.matmul %67, %54, %cst_39 {dimension_numbers = #tpu.dot_dimension_numbers<[1], [0], [0], [1], [0, 0, 1, 1], [], []>} : vector<16x16xf32>, vector<16x32xf32>, vector<16x32xf32> -> vector<16x32xf32>
    %69 = arith.addf %49, %68 : vector<16x32xf32>
    %70 = vector.extract_strided_slice %4 {offsets = [1, 0], sizes = [1, 32], strides = [1, 1]} : vector<4x32xf32> to vector<1x32xf32>
    %71 = vector.broadcast %70 : vector<1x32xf32> to vector<16x32xf32>
    %72 = arith.mulf %42, %71 : vector<16x32xf32>
    %73 = vector.broadcast %70 : vector<1x32xf32> to vector<16x32xf32>
    %74 = arith.mulf %48, %73 : vector<16x32xf32>
    %cst_40 = arith.constant dense<0.000000e+00> : vector<16x16xf32>
    %75 = tpu.matmul %72, %47, %cst_40 {dimension_numbers = #tpu.dot_dimension_numbers<[1], [1], [0], [0], [0, 0, 1, 0], [], []>} : vector<16x32xf32>, vector<16x32xf32>, vector<16x16xf32> -> vector<16x16xf32>
    %cst_41 = arith.constant 0.353553385 : f32
    %76 = vector.broadcast %cst_41 : f32 to vector<16x16xf32>
    %77 = arith.mulf %75, %76 : vector<16x16xf32>
    %78 = arith.addf %77, %3 : vector<16x16xf32>
    %cst_42 = arith.constant dense<0xFF800000> : vector<16xf32>
    %79 = vector.multi_reduction <maximumf>, %78, %cst_42 [1] : vector<16x16xf32> to vector<16xf32>
    %80 = vector.shape_cast %79 : vector<16xf32> to vector<16x1xf32>
    %81 = vector.broadcast %80 : vector<16x1xf32> to vector<16x16xf32>
    %82 = arith.subf %78, %81 : vector<16x16xf32>
    %83 = math.exp %82 : vector<16x16xf32>
    %cst_43 = arith.constant dense<0.000000e+00> : vector<16xf32>
    %84 = vector.multi_reduction <add>, %83, %cst_43 [1] : vector<16x16xf32> to vector<16xf32>
    %85 = vector.shape_cast %84 : vector<16xf32> to vector<16x1xf32>
    %86 = vector.broadcast %85 : vector<16x1xf32> to vector<16x16xf32>
    %87 = arith.divf %83, %86 : vector<16x16xf32>
    %cst_44 = arith.constant dense<0.000000e+00> : vector<16x32xf32>
    %88 = tpu.matmul %87, %74, %cst_44 {dimension_numbers = #tpu.dot_dimension_numbers<[1], [0], [0], [1], [0, 0, 1, 1], [], []>} : vector<16x16xf32>, vector<16x32xf32>, vector<16x32xf32> -> vector<16x32xf32>
    %89 = arith.addf %69, %88 : vector<16x32xf32>
    %90 = vector.extract_strided_slice %4 {offsets = [2, 0], sizes = [1, 32], strides = [1, 1]} : vector<4x32xf32> to vector<1x32xf32>
    %91 = vector.broadcast %90 : vector<1x32xf32> to vector<16x32xf32>
    %92 = arith.mulf %42, %91 : vector<16x32xf32>
    %93 = vector.broadcast %90 : vector<1x32xf32> to vector<16x32xf32>
    %94 = arith.mulf %48, %93 : vector<16x32xf32>
    %cst_45 = arith.constant dense<0.000000e+00> : vector<16x16xf32>
    %95 = tpu.matmul %92, %47, %cst_45 {dimension_numbers = #tpu.dot_dimension_numbers<[1], [1], [0], [0], [0, 0, 1, 0], [], []>} : vector<16x32xf32>, vector<16x32xf32>, vector<16x16xf32> -> vector<16x16xf32>
    %cst_46 = arith.constant 0.353553385 : f32
    %96 = vector.broadcast %cst_46 : f32 to vector<16x16xf32>
    %97 = arith.mulf %95, %96 : vector<16x16xf32>
    %98 = arith.addf %97, %3 : vector<16x16xf32>
    %cst_47 = arith.constant dense<0xFF800000> : vector<16xf32>
    %99 = vector.multi_reduction <maximumf>, %98, %cst_47 [1] : vector<16x16xf32> to vector<16xf32>
    %100 = vector.shape_cast %99 : vector<16xf32> to vector<16x1xf32>
    %101 = vector.broadcast %100 : vector<16x1xf32> to vector<16x16xf32>
    %102 = arith.subf %98, %101 : vector<16x16xf32>
    %103 = math.exp %102 : vector<16x16xf32>
    %cst_48 = arith.constant dense<0.000000e+00> : vector<16xf32>
    %104 = vector.multi_reduction <add>, %103, %cst_48 [1] : vector<16x16xf32> to vector<16xf32>
    %105 = vector.shape_cast %104 : vector<16xf32> to vector<16x1xf32>
    %106 = vector.broadcast %105 : vector<16x1xf32> to vector<16x16xf32>
    %107 = arith.divf %103, %106 : vector<16x16xf32>
    %cst_49 = arith.constant dense<0.000000e+00> : vector<16x32xf32>
    %108 = tpu.matmul %107, %94, %cst_49 {dimension_numbers = #tpu.dot_dimension_numbers<[1], [0], [0], [1], [0, 0, 1, 1], [], []>} : vector<16x16xf32>, vector<16x32xf32>, vector<16x32xf32> -> vector<16x32xf32>
    %109 = arith.addf %89, %108 : vector<16x32xf32>
    %110 = vector.extract_strided_slice %4 {offsets = [3, 0], sizes = [1, 32], strides = [1, 1]} : vector<4x32xf32> to vector<1x32xf32>
    %111 = vector.broadcast %110 : vector<1x32xf32> to vector<16x32xf32>
    %112 = arith.mulf %42, %111 : vector<16x32xf32>
    %113 = vector.broadcast %110 : vector<1x32xf32> to vector<16x32xf32>
    %114 = arith.mulf %48, %113 : vector<16x32xf32>
    %cst_50 = arith.constant dense<0.000000e+00> : vector<16x16xf32>
    %115 = tpu.matmul %112, %47, %cst_50 {dimension_numbers = #tpu.dot_dimension_numbers<[1], [1], [0], [0], [0, 0, 1, 0], [], []>} : vector<16x32xf32>, vector<16x32xf32>, vector<16x16xf32> -> vector<16x16xf32>
    %cst_51 = arith.constant 0.353553385 : f32
    %116 = vector.broadcast %cst_51 : f32 to vector<16x16xf32>
    %117 = arith.mulf %115, %116 : vector<16x16xf32>
    %118 = arith.addf %117, %3 : vector<16x16xf32>
    %cst_52 = arith.constant dense<0xFF800000> : vector<16xf32>
    %119 = vector.multi_reduction <maximumf>, %118, %cst_52 [1] : vector<16x16xf32> to vector<16xf32>
    %120 = vector.shape_cast %119 : vector<16xf32> to vector<16x1xf32>
    %121 = vector.broadcast %120 : vector<16x1xf32> to vector<16x16xf32>
    %122 = arith.subf %118, %121 : vector<16x16xf32>
    %123 = math.exp %122 : vector<16x16xf32>
    %cst_53 = arith.constant dense<0.000000e+00> : vector<16xf32>
    %124 = vector.multi_reduction <add>, %123, %cst_53 [1] : vector<16x16xf32> to vector<16xf32>
    %125 = vector.shape_cast %124 : vector<16xf32> to vector<16x1xf32>
    %126 = vector.broadcast %125 : vector<16x1xf32> to vector<16x16xf32>
    %127 = arith.divf %123, %126 : vector<16x16xf32>
    %cst_54 = arith.constant dense<0.000000e+00> : vector<16x32xf32>
    %128 = tpu.matmul %127, %114, %cst_54 {dimension_numbers = #tpu.dot_dimension_numbers<[1], [0], [0], [1], [0, 0, 1, 1], [], []>} : vector<16x16xf32>, vector<16x32xf32>, vector<16x32xf32> -> vector<16x32xf32>
    %129 = arith.addf %109, %128 : vector<16x32xf32>
    %cst_55 = arith.constant dense<0.000000e+00> : vector<16x32xf32>
    %130 = tpu.matmul %129, %8, %cst_55 {dimension_numbers = #tpu.dot_dimension_numbers<[1], [0], [0], [1], [0, 0, 1, 1], [], []>} : vector<16x32xf32>, vector<32x32xf32>, vector<16x32xf32> -> vector<16x32xf32>
    %131 = arith.addf %0, %130 : vector<16x32xf32>
    %cst_56 = arith.constant dense<0.000000e+00> : vector<16xf32>
    %132 = vector.multi_reduction <add>, %131, %cst_56 [1] : vector<16x32xf32> to vector<16xf32>
    %133 = vector.shape_cast %132 : vector<16xf32> to vector<16x1xf32>
    %cst_57 = arith.constant 3.200000e+01 : f32
    %134 = vector.broadcast %cst_57 : f32 to vector<16x1xf32>
    %135 = arith.divf %133, %134 : vector<16x1xf32>
    %136 = vector.broadcast %135 : vector<16x1xf32> to vector<16x32xf32>
    %137 = arith.subf %131, %136 : vector<16x32xf32>
    %138 = arith.mulf %137, %137 : vector<16x32xf32>
    %cst_58 = arith.constant dense<0.000000e+00> : vector<16xf32>
    %139 = vector.multi_reduction <add>, %138, %cst_58 [1] : vector<16x32xf32> to vector<16xf32>
    %140 = vector.shape_cast %139 : vector<16xf32> to vector<16x1xf32>
    %cst_59 = arith.constant 3.200000e+01 : f32
    %141 = vector.broadcast %cst_59 : f32 to vector<16x1xf32>
    %142 = arith.divf %140, %141 : vector<16x1xf32>
    %143 = vector.broadcast %135 : vector<16x1xf32> to vector<16x32xf32>
    %144 = arith.subf %131, %143 : vector<16x32xf32>
    %cst_60 = arith.constant 9.99999974E-6 : f32
    %145 = vector.broadcast %cst_60 : f32 to vector<16x1xf32>
    %146 = arith.addf %142, %145 : vector<16x1xf32>
    %147 = math.rsqrt %146 : vector<16x1xf32>
    %148 = vector.broadcast %147 : vector<16x1xf32> to vector<16x32xf32>
    %149 = arith.mulf %144, %148 : vector<16x32xf32>
    %150 = vector.broadcast %9 : vector<1x32xf32> to vector<16x32xf32>
    %151 = arith.mulf %149, %150 : vector<16x32xf32>
    %152 = vector.broadcast %10 : vector<1x32xf32> to vector<16x32xf32>
    %153 = arith.addf %151, %152 : vector<16x32xf32>
    %cst_61 = arith.constant dense<0.000000e+00> : vector<16x64xf32>
    %154 = tpu.matmul %153, %11, %cst_61 {dimension_numbers = #tpu.dot_dimension_numbers<[1], [0], [0], [1], [0, 0, 1, 1], [], []>} : vector<16x32xf32>, vector<32x64xf32>, vector<16x64xf32> -> vector<16x64xf32>
    %155 = vector.broadcast %12 : vector<1x64xf32> to vector<16x64xf32>
    %156 = arith.addf %154, %155 : vector<16x64xf32>
    %157 = arith.mulf %156, %156 : vector<16x64xf32>
    %158 = arith.mulf %156, %157 : vector<16x64xf32>
    %cst_62 = arith.constant 4.471500e-02 : f32
    %159 = vector.broadcast %cst_62 : f32 to vector<16x64xf32>
    %160 = arith.mulf %159, %158 : vector<16x64xf32>
    %161 = arith.addf %156, %160 : vector<16x64xf32>
    %cst_63 = arith.constant 0.797884583 : f32
    %162 = vector.broadcast %cst_63 : f32 to vector<16x64xf32>
    %163 = arith.mulf %162, %161 : vector<16x64xf32>
    %164 = math.tanh %163 : vector<16x64xf32>
    %cst_64 = arith.constant 1.000000e+00 : f32
    %165 = vector.broadcast %cst_64 : f32 to vector<16x64xf32>
    %166 = arith.addf %165, %164 : vector<16x64xf32>
    %cst_65 = arith.constant 5.000000e-01 : f32
    %167 = vector.broadcast %cst_65 : f32 to vector<16x64xf32>
    %168 = arith.mulf %167, %166 : vector<16x64xf32>
    %169 = arith.mulf %156, %168 : vector<16x64xf32>
    %cst_66 = arith.constant dense<0.000000e+00> : vector<16x32xf32>
    %170 = tpu.matmul %169, %13, %cst_66 {dimension_numbers = #tpu.dot_dimension_numbers<[1], [0], [0], [1], [0, 0, 1, 1], [], []>} : vector<16x64xf32>, vector<64x32xf32>, vector<16x32xf32> -> vector<16x32xf32>
    %171 = arith.addf %131, %170 : vector<16x32xf32>
    %172 = vector.broadcast %14 : vector<1x32xf32> to vector<16x32xf32>
    %173 = arith.addf %171, %172 : vector<16x32xf32>
    %c0_67 = arith.constant 0 : index
    %c0_68 = arith.constant 0 : index
    %174 = vector.load %arg15[%c0_67, %c0_68] : memref<1x32xf32, #tpu.memory_space<vmem>>, vector<1x32xf32>
    %c0_69 = arith.constant 0 : index
    %c0_70 = arith.constant 0 : index
    %175 = vector.load %arg16[%c0_69, %c0_70] : memref<1x32xf32, #tpu.memory_space<vmem>>, vector<1x32xf32>
    %c0_71 = arith.constant 0 : index
    %c0_72 = arith.constant 0 : index
    %176 = vector.load %arg17[%c0_71, %c0_72] : memref<32x160xf32, #tpu.memory_space<vmem>>, vector<32x160xf32>
    %c0_73 = arith.constant 0 : index
    %c0_74 = arith.constant 0 : index
    %177 = vector.load %arg18[%c0_73, %c0_74] : memref<32x32xf32, #tpu.memory_space<vmem>>, vector<32x32xf32>
    %c0_75 = arith.constant 0 : index
    %c0_76 = arith.constant 0 : index
    %178 = vector.load %arg19[%c0_75, %c0_76] : memref<1x32xf32, #tpu.memory_space<vmem>>, vector<1x32xf32>
    %c0_77 = arith.constant 0 : index
    %c0_78 = arith.constant 0 : index
    %179 = vector.load %arg20[%c0_77, %c0_78] : memref<1x32xf32, #tpu.memory_space<vmem>>, vector<1x32xf32>
    %c0_79 = arith.constant 0 : index
    %c0_80 = arith.constant 0 : index
    %180 = vector.load %arg21[%c0_79, %c0_80] : memref<32x64xf32, #tpu.memory_space<vmem>>, vector<32x64xf32>
    %c0_81 = arith.constant 0 : index
    %c0_82 = arith.constant 0 : index
    %181 = vector.load %arg22[%c0_81, %c0_82] : memref<1x64xf32, #tpu.memory_space<vmem>>, vector<1x64xf32>
    %c0_83 = arith.constant 0 : index
    %c0_84 = arith.constant 0 : index
    %182 = vector.load %arg23[%c0_83, %c0_84] : memref<64x32xf32, #tpu.memory_space<vmem>>, vector<64x32xf32>
    %c0_85 = arith.constant 0 : index
    %c0_86 = arith.constant 0 : index
    %183 = vector.load %arg24[%c0_85, %c0_86] : memref<1x32xf32, #tpu.memory_space<vmem>>, vector<1x32xf32>
    %cst_87 = arith.constant dense<0.000000e+00> : vector<16xf32>
    %184 = vector.multi_reduction <add>, %173, %cst_87 [1] : vector<16x32xf32> to vector<16xf32>
    %185 = vector.shape_cast %184 : vector<16xf32> to vector<16x1xf32>
    %cst_88 = arith.constant 3.200000e+01 : f32
    %186 = vector.broadcast %cst_88 : f32 to vector<16x1xf32>
    %187 = arith.divf %185, %186 : vector<16x1xf32>
    %188 = vector.broadcast %187 : vector<16x1xf32> to vector<16x32xf32>
    %189 = arith.subf %173, %188 : vector<16x32xf32>
    %190 = arith.mulf %189, %189 : vector<16x32xf32>
    %cst_89 = arith.constant dense<0.000000e+00> : vector<16xf32>
    %191 = vector.multi_reduction <add>, %190, %cst_89 [1] : vector<16x32xf32> to vector<16xf32>
    %192 = vector.shape_cast %191 : vector<16xf32> to vector<16x1xf32>
    %cst_90 = arith.constant 3.200000e+01 : f32
    %193 = vector.broadcast %cst_90 : f32 to vector<16x1xf32>
    %194 = arith.divf %192, %193 : vector<16x1xf32>
    %195 = vector.broadcast %187 : vector<16x1xf32> to vector<16x32xf32>
    %196 = arith.subf %173, %195 : vector<16x32xf32>
    %cst_91 = arith.constant 9.99999974E-6 : f32
    %197 = vector.broadcast %cst_91 : f32 to vector<16x1xf32>
    %198 = arith.addf %194, %197 : vector<16x1xf32>
    %199 = math.rsqrt %198 : vector<16x1xf32>
    %200 = vector.broadcast %199 : vector<16x1xf32> to vector<16x32xf32>
    %201 = arith.mulf %196, %200 : vector<16x32xf32>
    %202 = vector.broadcast %174 : vector<1x32xf32> to vector<16x32xf32>
    %203 = arith.mulf %201, %202 : vector<16x32xf32>
    %204 = vector.broadcast %175 : vector<1x32xf32> to vector<16x32xf32>
    %205 = arith.addf %203, %204 : vector<16x32xf32>
    %cst_92 = arith.constant dense<0.000000e+00> : vector<16x160xf32>
    %206 = tpu.matmul %205, %176, %cst_92 {dimension_numbers = #tpu.dot_dimension_numbers<[1], [0], [0], [1], [0, 0, 1, 1], [], []>} : vector<16x32xf32>, vector<32x160xf32>, vector<16x160xf32> -> vector<16x160xf32>
    %207 = vector.extract_strided_slice %206 {offsets = [0, 0], sizes = [16, 32], strides = [1, 1]} : vector<16x160xf32> to vector<16x32xf32>
    %208 = arith.mulf %207, %1 : vector<16x32xf32>
    %209 = vector.extract_strided_slice %206 {offsets = [0, 96], sizes = [16, 32], strides = [1, 1]} : vector<16x160xf32> to vector<16x32xf32>
    %210 = arith.mulf %209, %2 : vector<16x32xf32>
    %211 = arith.addf %208, %210 : vector<16x32xf32>
    %212 = vector.extract_strided_slice %206 {offsets = [0, 32], sizes = [16, 32], strides = [1, 1]} : vector<16x160xf32> to vector<16x32xf32>
    %213 = arith.mulf %212, %1 : vector<16x32xf32>
    %214 = vector.extract_strided_slice %206 {offsets = [0, 128], sizes = [16, 32], strides = [1, 1]} : vector<16x160xf32> to vector<16x32xf32>
    %215 = arith.mulf %214, %2 : vector<16x32xf32>
    %216 = arith.addf %213, %215 : vector<16x32xf32>
    %217 = vector.extract_strided_slice %206 {offsets = [0, 64], sizes = [16, 32], strides = [1, 1]} : vector<16x160xf32> to vector<16x32xf32>
    %cst_93 = arith.constant 0.000000e+00 : f32
    %218 = vector.broadcast %cst_93 : f32 to vector<16x32xf32>
    %219 = vector.extract_strided_slice %4 {offsets = [0, 0], sizes = [1, 32], strides = [1, 1]} : vector<4x32xf32> to vector<1x32xf32>
    %220 = vector.broadcast %219 : vector<1x32xf32> to vector<16x32xf32>
    %221 = arith.mulf %211, %220 : vector<16x32xf32>
    %222 = vector.broadcast %219 : vector<1x32xf32> to vector<16x32xf32>
    %223 = arith.mulf %217, %222 : vector<16x32xf32>
    %cst_94 = arith.constant dense<0.000000e+00> : vector<16x16xf32>
    %224 = tpu.matmul %221, %216, %cst_94 {dimension_numbers = #tpu.dot_dimension_numbers<[1], [1], [0], [0], [0, 0, 1, 0], [], []>} : vector<16x32xf32>, vector<16x32xf32>, vector<16x16xf32> -> vector<16x16xf32>
    %cst_95 = arith.constant 0.353553385 : f32
    %225 = vector.broadcast %cst_95 : f32 to vector<16x16xf32>
    %226 = arith.mulf %224, %225 : vector<16x16xf32>
    %227 = arith.addf %226, %3 : vector<16x16xf32>
    %cst_96 = arith.constant dense<0xFF800000> : vector<16xf32>
    %228 = vector.multi_reduction <maximumf>, %227, %cst_96 [1] : vector<16x16xf32> to vector<16xf32>
    %229 = vector.shape_cast %228 : vector<16xf32> to vector<16x1xf32>
    %230 = vector.broadcast %229 : vector<16x1xf32> to vector<16x16xf32>
    %231 = arith.subf %227, %230 : vector<16x16xf32>
    %232 = math.exp %231 : vector<16x16xf32>
    %cst_97 = arith.constant dense<0.000000e+00> : vector<16xf32>
    %233 = vector.multi_reduction <add>, %232, %cst_97 [1] : vector<16x16xf32> to vector<16xf32>
    %234 = vector.shape_cast %233 : vector<16xf32> to vector<16x1xf32>
    %235 = vector.broadcast %234 : vector<16x1xf32> to vector<16x16xf32>
    %236 = arith.divf %232, %235 : vector<16x16xf32>
    %cst_98 = arith.constant dense<0.000000e+00> : vector<16x32xf32>
    %237 = tpu.matmul %236, %223, %cst_98 {dimension_numbers = #tpu.dot_dimension_numbers<[1], [0], [0], [1], [0, 0, 1, 1], [], []>} : vector<16x16xf32>, vector<16x32xf32>, vector<16x32xf32> -> vector<16x32xf32>
    %238 = arith.addf %218, %237 : vector<16x32xf32>
    %239 = vector.extract_strided_slice %4 {offsets = [1, 0], sizes = [1, 32], strides = [1, 1]} : vector<4x32xf32> to vector<1x32xf32>
    %240 = vector.broadcast %239 : vector<1x32xf32> to vector<16x32xf32>
    %241 = arith.mulf %211, %240 : vector<16x32xf32>
    %242 = vector.broadcast %239 : vector<1x32xf32> to vector<16x32xf32>
    %243 = arith.mulf %217, %242 : vector<16x32xf32>
    %cst_99 = arith.constant dense<0.000000e+00> : vector<16x16xf32>
    %244 = tpu.matmul %241, %216, %cst_99 {dimension_numbers = #tpu.dot_dimension_numbers<[1], [1], [0], [0], [0, 0, 1, 0], [], []>} : vector<16x32xf32>, vector<16x32xf32>, vector<16x16xf32> -> vector<16x16xf32>
    %cst_100 = arith.constant 0.353553385 : f32
    %245 = vector.broadcast %cst_100 : f32 to vector<16x16xf32>
    %246 = arith.mulf %244, %245 : vector<16x16xf32>
    %247 = arith.addf %246, %3 : vector<16x16xf32>
    %cst_101 = arith.constant dense<0xFF800000> : vector<16xf32>
    %248 = vector.multi_reduction <maximumf>, %247, %cst_101 [1] : vector<16x16xf32> to vector<16xf32>
    %249 = vector.shape_cast %248 : vector<16xf32> to vector<16x1xf32>
    %250 = vector.broadcast %249 : vector<16x1xf32> to vector<16x16xf32>
    %251 = arith.subf %247, %250 : vector<16x16xf32>
    %252 = math.exp %251 : vector<16x16xf32>
    %cst_102 = arith.constant dense<0.000000e+00> : vector<16xf32>
    %253 = vector.multi_reduction <add>, %252, %cst_102 [1] : vector<16x16xf32> to vector<16xf32>
    %254 = vector.shape_cast %253 : vector<16xf32> to vector<16x1xf32>
    %255 = vector.broadcast %254 : vector<16x1xf32> to vector<16x16xf32>
    %256 = arith.divf %252, %255 : vector<16x16xf32>
    %cst_103 = arith.constant dense<0.000000e+00> : vector<16x32xf32>
    %257 = tpu.matmul %256, %243, %cst_103 {dimension_numbers = #tpu.dot_dimension_numbers<[1], [0], [0], [1], [0, 0, 1, 1], [], []>} : vector<16x16xf32>, vector<16x32xf32>, vector<16x32xf32> -> vector<16x32xf32>
    %258 = arith.addf %238, %257 : vector<16x32xf32>
    %259 = vector.extract_strided_slice %4 {offsets = [2, 0], sizes = [1, 32], strides = [1, 1]} : vector<4x32xf32> to vector<1x32xf32>
    %260 = vector.broadcast %259 : vector<1x32xf32> to vector<16x32xf32>
    %261 = arith.mulf %211, %260 : vector<16x32xf32>
    %262 = vector.broadcast %259 : vector<1x32xf32> to vector<16x32xf32>
    %263 = arith.mulf %217, %262 : vector<16x32xf32>
    %cst_104 = arith.constant dense<0.000000e+00> : vector<16x16xf32>
    %264 = tpu.matmul %261, %216, %cst_104 {dimension_numbers = #tpu.dot_dimension_numbers<[1], [1], [0], [0], [0, 0, 1, 0], [], []>} : vector<16x32xf32>, vector<16x32xf32>, vector<16x16xf32> -> vector<16x16xf32>
    %cst_105 = arith.constant 0.353553385 : f32
    %265 = vector.broadcast %cst_105 : f32 to vector<16x16xf32>
    %266 = arith.mulf %264, %265 : vector<16x16xf32>
    %267 = arith.addf %266, %3 : vector<16x16xf32>
    %cst_106 = arith.constant dense<0xFF800000> : vector<16xf32>
    %268 = vector.multi_reduction <maximumf>, %267, %cst_106 [1] : vector<16x16xf32> to vector<16xf32>
    %269 = vector.shape_cast %268 : vector<16xf32> to vector<16x1xf32>
    %270 = vector.broadcast %269 : vector<16x1xf32> to vector<16x16xf32>
    %271 = arith.subf %267, %270 : vector<16x16xf32>
    %272 = math.exp %271 : vector<16x16xf32>
    %cst_107 = arith.constant dense<0.000000e+00> : vector<16xf32>
    %273 = vector.multi_reduction <add>, %272, %cst_107 [1] : vector<16x16xf32> to vector<16xf32>
    %274 = vector.shape_cast %273 : vector<16xf32> to vector<16x1xf32>
    %275 = vector.broadcast %274 : vector<16x1xf32> to vector<16x16xf32>
    %276 = arith.divf %272, %275 : vector<16x16xf32>
    %cst_108 = arith.constant dense<0.000000e+00> : vector<16x32xf32>
    %277 = tpu.matmul %276, %263, %cst_108 {dimension_numbers = #tpu.dot_dimension_numbers<[1], [0], [0], [1], [0, 0, 1, 1], [], []>} : vector<16x16xf32>, vector<16x32xf32>, vector<16x32xf32> -> vector<16x32xf32>
    %278 = arith.addf %258, %277 : vector<16x32xf32>
    %279 = vector.extract_strided_slice %4 {offsets = [3, 0], sizes = [1, 32], strides = [1, 1]} : vector<4x32xf32> to vector<1x32xf32>
    %280 = vector.broadcast %279 : vector<1x32xf32> to vector<16x32xf32>
    %281 = arith.mulf %211, %280 : vector<16x32xf32>
    %282 = vector.broadcast %279 : vector<1x32xf32> to vector<16x32xf32>
    %283 = arith.mulf %217, %282 : vector<16x32xf32>
    %cst_109 = arith.constant dense<0.000000e+00> : vector<16x16xf32>
    %284 = tpu.matmul %281, %216, %cst_109 {dimension_numbers = #tpu.dot_dimension_numbers<[1], [1], [0], [0], [0, 0, 1, 0], [], []>} : vector<16x32xf32>, vector<16x32xf32>, vector<16x16xf32> -> vector<16x16xf32>
    %cst_110 = arith.constant 0.353553385 : f32
    %285 = vector.broadcast %cst_110 : f32 to vector<16x16xf32>
    %286 = arith.mulf %284, %285 : vector<16x16xf32>
    %287 = arith.addf %286, %3 : vector<16x16xf32>
    %cst_111 = arith.constant dense<0xFF800000> : vector<16xf32>
    %288 = vector.multi_reduction <maximumf>, %287, %cst_111 [1] : vector<16x16xf32> to vector<16xf32>
    %289 = vector.shape_cast %288 : vector<16xf32> to vector<16x1xf32>
    %290 = vector.broadcast %289 : vector<16x1xf32> to vector<16x16xf32>
    %291 = arith.subf %287, %290 : vector<16x16xf32>
    %292 = math.exp %291 : vector<16x16xf32>
    %cst_112 = arith.constant dense<0.000000e+00> : vector<16xf32>
    %293 = vector.multi_reduction <add>, %292, %cst_112 [1] : vector<16x16xf32> to vector<16xf32>
    %294 = vector.shape_cast %293 : vector<16xf32> to vector<16x1xf32>
    %295 = vector.broadcast %294 : vector<16x1xf32> to vector<16x16xf32>
    %296 = arith.divf %292, %295 : vector<16x16xf32>
    %cst_113 = arith.constant dense<0.000000e+00> : vector<16x32xf32>
    %297 = tpu.matmul %296, %283, %cst_113 {dimension_numbers = #tpu.dot_dimension_numbers<[1], [0], [0], [1], [0, 0, 1, 1], [], []>} : vector<16x16xf32>, vector<16x32xf32>, vector<16x32xf32> -> vector<16x32xf32>
    %298 = arith.addf %278, %297 : vector<16x32xf32>
    %cst_114 = arith.constant dense<0.000000e+00> : vector<16x32xf32>
    %299 = tpu.matmul %298, %177, %cst_114 {dimension_numbers = #tpu.dot_dimension_numbers<[1], [0], [0], [1], [0, 0, 1, 1], [], []>} : vector<16x32xf32>, vector<32x32xf32>, vector<16x32xf32> -> vector<16x32xf32>
    %300 = arith.addf %173, %299 : vector<16x32xf32>
    %cst_115 = arith.constant dense<0.000000e+00> : vector<16xf32>
    %301 = vector.multi_reduction <add>, %300, %cst_115 [1] : vector<16x32xf32> to vector<16xf32>
    %302 = vector.shape_cast %301 : vector<16xf32> to vector<16x1xf32>
    %cst_116 = arith.constant 3.200000e+01 : f32
    %303 = vector.broadcast %cst_116 : f32 to vector<16x1xf32>
    %304 = arith.divf %302, %303 : vector<16x1xf32>
    %305 = vector.broadcast %304 : vector<16x1xf32> to vector<16x32xf32>
    %306 = arith.subf %300, %305 : vector<16x32xf32>
    %307 = arith.mulf %306, %306 : vector<16x32xf32>
    %cst_117 = arith.constant dense<0.000000e+00> : vector<16xf32>
    %308 = vector.multi_reduction <add>, %307, %cst_117 [1] : vector<16x32xf32> to vector<16xf32>
    %309 = vector.shape_cast %308 : vector<16xf32> to vector<16x1xf32>
    %cst_118 = arith.constant 3.200000e+01 : f32
    %310 = vector.broadcast %cst_118 : f32 to vector<16x1xf32>
    %311 = arith.divf %309, %310 : vector<16x1xf32>
    %312 = vector.broadcast %304 : vector<16x1xf32> to vector<16x32xf32>
    %313 = arith.subf %300, %312 : vector<16x32xf32>
    %cst_119 = arith.constant 9.99999974E-6 : f32
    %314 = vector.broadcast %cst_119 : f32 to vector<16x1xf32>
    %315 = arith.addf %311, %314 : vector<16x1xf32>
    %316 = math.rsqrt %315 : vector<16x1xf32>
    %317 = vector.broadcast %316 : vector<16x1xf32> to vector<16x32xf32>
    %318 = arith.mulf %313, %317 : vector<16x32xf32>
    %319 = vector.broadcast %178 : vector<1x32xf32> to vector<16x32xf32>
    %320 = arith.mulf %318, %319 : vector<16x32xf32>
    %321 = vector.broadcast %179 : vector<1x32xf32> to vector<16x32xf32>
    %322 = arith.addf %320, %321 : vector<16x32xf32>
    %cst_120 = arith.constant dense<0.000000e+00> : vector<16x64xf32>
    %323 = tpu.matmul %322, %180, %cst_120 {dimension_numbers = #tpu.dot_dimension_numbers<[1], [0], [0], [1], [0, 0, 1, 1], [], []>} : vector<16x32xf32>, vector<32x64xf32>, vector<16x64xf32> -> vector<16x64xf32>
    %324 = vector.broadcast %181 : vector<1x64xf32> to vector<16x64xf32>
    %325 = arith.addf %323, %324 : vector<16x64xf32>
    %326 = arith.mulf %325, %325 : vector<16x64xf32>
    %327 = arith.mulf %325, %326 : vector<16x64xf32>
    %cst_121 = arith.constant 4.471500e-02 : f32
    %328 = vector.broadcast %cst_121 : f32 to vector<16x64xf32>
    %329 = arith.mulf %328, %327 : vector<16x64xf32>
    %330 = arith.addf %325, %329 : vector<16x64xf32>
    %cst_122 = arith.constant 0.797884583 : f32
    %331 = vector.broadcast %cst_122 : f32 to vector<16x64xf32>
    %332 = arith.mulf %331, %330 : vector<16x64xf32>
    %333 = math.tanh %332 : vector<16x64xf32>
    %cst_123 = arith.constant 1.000000e+00 : f32
    %334 = vector.broadcast %cst_123 : f32 to vector<16x64xf32>
    %335 = arith.addf %334, %333 : vector<16x64xf32>
    %cst_124 = arith.constant 5.000000e-01 : f32
    %336 = vector.broadcast %cst_124 : f32 to vector<16x64xf32>
    %337 = arith.mulf %336, %335 : vector<16x64xf32>
    %338 = arith.mulf %325, %337 : vector<16x64xf32>
    %cst_125 = arith.constant dense<0.000000e+00> : vector<16x32xf32>
    %339 = tpu.matmul %338, %182, %cst_125 {dimension_numbers = #tpu.dot_dimension_numbers<[1], [0], [0], [1], [0, 0, 1, 1], [], []>} : vector<16x64xf32>, vector<64x32xf32>, vector<16x32xf32> -> vector<16x32xf32>
    %340 = arith.addf %300, %339 : vector<16x32xf32>
    %341 = vector.broadcast %183 : vector<1x32xf32> to vector<16x32xf32>
    %342 = arith.addf %340, %341 : vector<16x32xf32>
    %c0_126 = arith.constant 0 : index
    %c0_127 = arith.constant 0 : index
    %343 = vector.load %arg25[%c0_126, %c0_127] : memref<1x32xf32, #tpu.memory_space<vmem>>, vector<1x32xf32>
    %c0_128 = arith.constant 0 : index
    %c0_129 = arith.constant 0 : index
    %344 = vector.load %arg26[%c0_128, %c0_129] : memref<1x32xf32, #tpu.memory_space<vmem>>, vector<1x32xf32>
    %c0_130 = arith.constant 0 : index
    %c0_131 = arith.constant 0 : index
    %345 = vector.load %arg27[%c0_130, %c0_131] : memref<32x256xf32, #tpu.memory_space<vmem>>, vector<32x256xf32>
    %cst_132 = arith.constant dense<0.000000e+00> : vector<16xf32>
    %346 = vector.multi_reduction <add>, %342, %cst_132 [1] : vector<16x32xf32> to vector<16xf32>
    %347 = vector.shape_cast %346 : vector<16xf32> to vector<16x1xf32>
    %cst_133 = arith.constant 3.200000e+01 : f32
    %348 = vector.broadcast %cst_133 : f32 to vector<16x1xf32>
    %349 = arith.divf %347, %348 : vector<16x1xf32>
    %350 = vector.broadcast %349 : vector<16x1xf32> to vector<16x32xf32>
    %351 = arith.subf %342, %350 : vector<16x32xf32>
    %352 = arith.mulf %351, %351 : vector<16x32xf32>
    %cst_134 = arith.constant dense<0.000000e+00> : vector<16xf32>
    %353 = vector.multi_reduction <add>, %352, %cst_134 [1] : vector<16x32xf32> to vector<16xf32>
    %354 = vector.shape_cast %353 : vector<16xf32> to vector<16x1xf32>
    %cst_135 = arith.constant 3.200000e+01 : f32
    %355 = vector.broadcast %cst_135 : f32 to vector<16x1xf32>
    %356 = arith.divf %354, %355 : vector<16x1xf32>
    %357 = vector.broadcast %349 : vector<16x1xf32> to vector<16x32xf32>
    %358 = arith.subf %342, %357 : vector<16x32xf32>
    %cst_136 = arith.constant 9.99999974E-6 : f32
    %359 = vector.broadcast %cst_136 : f32 to vector<16x1xf32>
    %360 = arith.addf %356, %359 : vector<16x1xf32>
    %361 = math.rsqrt %360 : vector<16x1xf32>
    %362 = vector.broadcast %361 : vector<16x1xf32> to vector<16x32xf32>
    %363 = arith.mulf %358, %362 : vector<16x32xf32>
    %364 = vector.broadcast %343 : vector<1x32xf32> to vector<16x32xf32>
    %365 = arith.mulf %363, %364 : vector<16x32xf32>
    %366 = vector.broadcast %344 : vector<1x32xf32> to vector<16x32xf32>
    %367 = arith.addf %365, %366 : vector<16x32xf32>
    %cst_137 = arith.constant dense<0.000000e+00> : vector<16x256xf32>
    %368 = tpu.matmul %367, %345, %cst_137 {dimension_numbers = #tpu.dot_dimension_numbers<[1], [0], [0], [1], [0, 0, 1, 1], [], []>} : vector<16x32xf32>, vector<32x256xf32>, vector<16x256xf32> -> vector<16x256xf32>
    %c0_138 = arith.constant 0 : index
    %c0_139 = arith.constant 0 : index
    %369 = vector.load %arg28[%c0_138, %c0_139] : memref<16x256xf32, #tpu.memory_space<vmem>>, vector<16x256xf32>
    tpu.vector_store %arg28[%c0_138, %c0_139], %368 {strides = array<i32>} : memref<16x256xf32, #tpu.memory_space<vmem>>, vector<16x256xf32>,
    return
  }
}

</mosaic_0001>

<llo_original>
// kernel: msingi1_forward.1
$region0: #{msingi1_forward.1}
  #allocation0 [shape = 'u32[]', space=smem, size = 0x4, offset = 0x4, fixed_abs, tag = 'smem constant byte address 0x4 - core index']
  #allocation1 [shape = 'u32[72,128]{1,0:T(1,128)}', space=vmem, size = 0x9000, scoped, tag = 'internal scratch']
  %s0 = inlined_call_operand.vmem [shape: f32[16,32], index: 0, kind: input, shape index: {}]
  %s1 = inlined_call_operand.vmem [shape: f32[16,32], index: 1, kind: input, shape index: {}]
  %s2 = inlined_call_operand.vmem [shape: f32[16,32], index: 2, kind: input, shape index: {}]
  %s3 = inlined_call_operand.vmem [shape: f32[16,16], index: 3, kind: input, shape index: {}]
  %s4 = inlined_call_operand.vmem [shape: f32[4,32], index: 4, kind: input, shape index: {}]
  %s5 = inlined_call_operand.vmem [shape: f32[1,32], index: 5, kind: input, shape index: {}]
  %s6 = inlined_call_operand.vmem [shape: f32[1,32], index: 6, kind: input, shape index: {}]
  %s7 = inlined_call_operand.vmem [shape: f32[32,160], index: 7, kind: input, shape index: {}]
  %s8 = inlined_call_operand.vmem [shape: f32[32,32], index: 8, kind: input, shape index: {}]
  %s9 = inlined_call_operand.vmem [shape: f32[1,32], index: 9, kind: input, shape index: {}]
  %s10 = inlined_call_operand.vmem [shape: f32[1,32], index: 10, kind: input, shape index: {}]
  %s11 = inlined_call_operand.vmem [shape: f32[32,64], index: 11, kind: input, shape index: {}]
  %s12 = inlined_call_operand.vmem [shape: f32[1,64], index: 12, kind: input, shape index: {}]
  %s13 = inlined_call_operand.vmem [shape: f32[64,32], index: 13, kind: input, shape index: {}]
  %s14 = inlined_call_operand.vmem [shape: f32[1,32], index: 14, kind: input, shape index: {}]
  %s15 = inlined_call_operand.vmem [shape: f32[1,32], index: 15, kind: input, shape index: {}]
  %s16 = inlined_call_operand.vmem [shape: f32[1,32], index: 16, kind: input, shape index: {}]
  %s17 = inlined_call_operand.vmem [shape: f32[32,160], index: 17, kind: input, shape index: {}]
  %s18 = inlined_call_operand.vmem [shape: f32[32,32], index: 18, kind: input, shape index: {}]
  %s19 = inlined_call_operand.vmem [shape: f32[1,32], index: 19, kind: input, shape index: {}]
  %s20 = inlined_call_operand.vmem [shape: f32[1,32], index: 20, kind: input, shape index: {}]
  %s21 = inlined_call_operand.vmem [shape: f32[32,64], index: 21, kind: input, shape index: {}]
  %s22 = inlined_call_operand.vmem [shape: f32[1,64], index: 22, kind: input, shape index: {}]
  %s23 = inlined_call_operand.vmem [shape: f32[64,32], index: 23, kind: input, shape index: {}]
  %s24 = inlined_call_operand.vmem [shape: f32[1,32], index: 24, kind: input, shape index: {}]
  %s25 = inlined_call_operand.vmem [shape: f32[1,32], index: 25, kind: input, shape index: {}]
  %s26 = inlined_call_operand.vmem [shape: f32[1,32], index: 26, kind: input, shape index: {}]
  %s27 = inlined_call_operand.vmem [shape: f32[32,256], index: 27, kind: input, shape index: {}]
  %s28 = inlined_call_operand.hbm [shape: f32[16,256], index: 28, kind: output, shape index: {}]
  %s29 = sld [smem:[#allocation0]]
  $region122: #{msingi1_forward.1} parent=0
    _
  %s31 = ssub.s32 1, %s29
  %s32 = scalar_select 0, %s31, %s29
  $region1: #{msingi1_forward.1} parent=0
    #allocation2 [shape = 'u8[16384]{0}', space=vmem, size = 0x4000, scoped, tag = 'output window, operand 0, single buffered']
    #allocation3 [shape = 's32[1]{0}', space=sflag, size = 0x4, scoped, tag = 'scoped memory for msingi1_forward.1']
    %33 = vsyncpa [#allocation3], 0
    // Predicated region
    $region2: #{msingi1_forward.1} parent=1 // pred_check
      _
    $region3: #{msingi1_forward.1} parent=1 // pred_check_branch
      %35 = sbr.rel (0) target = $region5
    $region4: #{msingi1_forward.1} parent=1 // pred_region
      _
    $region5: #{msingi1_forward.1} parent=1 // pred_fallthru
      _
    // Predicated region
    $region6: #{msingi1_forward.1} parent=1 // pred_check
      _
    $region7: #{msingi1_forward.1} parent=1 // pred_check_branch
      %37 = sbr.rel (0) target = $region9
    $region8: #{msingi1_forward.1} parent=1 // pred_region
      _
    $region9: #{msingi1_forward.1} parent=1 // pred_fallthru
      _
    // Predicated region
    $region10: #{msingi1_forward.1} parent=1 // pred_check
      _
    $region11: #{msingi1_forward.1} parent=1 // pred_check_branch
      %39 = sbr.rel (0) target = $region13
    $region12: #{msingi1_forward.1} parent=1 // pred_region
      _
    $region13: #{msingi1_forward.1} parent=1 // pred_fallthru
      _
    // Predicated region
    $region14: #{msingi1_forward.1} parent=1 // pred_check
      _
    $region15: #{msingi1_forward.1} parent=1 // pred_check_branch
      %41 = sbr.rel (0) target = $region17
    $region16: #{msingi1_forward.1} parent=1 // pred_region
      _
    $region17: #{msingi1_forward.1} parent=1 // pred_fallthru
      _
    // Predicated region
    $region18: #{msingi1_forward.1} parent=1 // pred_check
      _
    $region19: #{msingi1_forward.1} parent=1 // pred_check_branch
      %43 = sbr.rel (0) target = $region21
    $region20: #{msingi1_forward.1} parent=1 // pred_region
      _
    $region21: #{msingi1_forward.1} parent=1 // pred_fallthru
      _
    // Predicated region
    $region22: #{msingi1_forward.1} parent=1 // pred_check
      _
    $region23: #{msingi1_forward.1} parent=1 // pred_check_branch
      %45 = sbr.rel (0) target = $region25
    $region24: #{msingi1_forward.1} parent=1 // pred_region
      _
    $region25: #{msingi1_forward.1} parent=1 // pred_fallthru
      _
    // Predicated region
    $region26: #{msingi1_forward.1} parent=1 // pred_check
      _
    $region27: #{msingi1_forward.1} parent=1 // pred_check_branch
      %47 = sbr.rel (0) target = $region29
    $region28: #{msingi1_forward.1} parent=1 // pred_region
      _
    $region29: #{msingi1_forward.1} parent=1 // pred_fallthru
      _
    // Predicated region
    $region30: #{msingi1_forward.1} parent=1 // pred_check
      _
    $region31: #{msingi1_forward.1} parent=1 // pred_check_branch
      %49 = sbr.rel (0) target = $region33
    $region32: #{msingi1_forward.1} parent=1 // pred_region
      _
    $region33: #{msingi1_forward.1} parent=1 // pred_fallthru
      _
    // Predicated region
    $region34: #{msingi1_forward.1} parent=1 // pred_check
      _
    $region35: #{msingi1_forward.1} parent=1 // pred_check_branch
      %51 = sbr.rel (0) target = $region37
    $region36: #{msingi1_forward.1} parent=1 // pred_region
      _
    $region37: #{msingi1_forward.1} parent=1 // pred_fallthru
      _
    // Predicated region
    $region38: #{msingi1_forward.1} parent=1 // pred_check
      _
    $region39: #{msingi1_forward.1} parent=1 // pred_check_branch
      %53 = sbr.rel (0) target = $region41
    $region40: #{msingi1_forward.1} parent=1 // pred_region
      _
    $region41: #{msingi1_forward.1} parent=1 // pred_fallthru
      _
    // Predicated region
    $region42: #{msingi1_forward.1} parent=1 // pred_check
      _
    $region43: #{msingi1_forward.1} parent=1 // pred_check_branch
      %55 = sbr.rel (0) target = $region45
    $region44: #{msingi1_forward.1} parent=1 // pred_region
      _
    $region45: #{msingi1_forward.1} parent=1 // pred_fallthru
      _
    // Predicated region
    $region46: #{msingi1_forward.1} parent=1 // pred_check
      _
    $region47: #{msingi1_forward.1} parent=1 // pred_check_branch
      %57 = sbr.rel (0) target = $region49
    $region48: #{msingi1_forward.1} parent=1 // pred_region
      _
    $region49: #{msingi1_forward.1} parent=1 // pred_fallthru
      _
    // Predicated region
    $region50: #{msingi1_forward.1} parent=1 // pred_check
      _
    $region51: #{msingi1_forward.1} parent=1 // pred_check_branch
      %59 = sbr.rel (0) target = $region53
    $region52: #{msingi1_forward.1} parent=1 // pred_region
      _
    $region53: #{msingi1_forward.1} parent=1 // pred_fallthru
      _
    // Predicated region
    $region54: #{msingi1_forward.1} parent=1 // pred_check
      _
    $region55: #{msingi1_forward.1} parent=1 // pred_check_branch
      %61 = sbr.rel (0) target = $region57
    $region56: #{msingi1_forward.1} parent=1 // pred_region
      _
    $region57: #{msingi1_forward.1} parent=1 // pred_fallthru
      _
    // Predicated region
    $region58: #{msingi1_forward.1} parent=1 // pred_check
      _
    $region59: #{msingi1_forward.1} parent=1 // pred_check_branch
      %63 = sbr.rel (0) target = $region61
    $region60: #{msingi1_forward.1} parent=1 // pred_region
      _
    $region61: #{msingi1_forward.1} parent=1 // pred_fallthru
      _
    // Predicated region
    $region62: #{msingi1_forward.1} parent=1 // pred_check
      _
    $region63: #{msingi1_forward.1} parent=1 // pred_check_branch
      %65 = sbr.rel (0) target = $region65
    $region64: #{msingi1_forward.1} parent=1 // pred_region
      _
    $region65: #{msingi1_forward.1} parent=1 // pred_fallthru
      _
    // Predicated region
    $region66: #{msingi1_forward.1} parent=1 // pred_check
      _
    $region67: #{msingi1_forward.1} parent=1 // pred_check_branch
      %67 = sbr.rel (0) target = $region69
    $region68: #{msingi1_forward.1} parent=1 // pred_region
      _
    $region69: #{msingi1_forward.1} parent=1 // pred_fallthru
      _
    // Predicated region
    $region70: #{msingi1_forward.1} parent=1 // pred_check
      _
    $region71: #{msingi1_forward.1} parent=1 // pred_check_branch
      %69 = sbr.rel (0) target = $region73
    $region72: #{msingi1_forward.1} parent=1 // pred_region
      _
    $region73: #{msingi1_forward.1} parent=1 // pred_fallthru
      _
    // Predicated region
    $region74: #{msingi1_forward.1} parent=1 // pred_check
      _
    $region75: #{msingi1_forward.1} parent=1 // pred_check_branch
      %71 = sbr.rel (0) target = $region77
    $region76: #{msingi1_forward.1} parent=1 // pred_region
      _
    $region77: #{msingi1_forward.1} parent=1 // pred_fallthru
      _
    // Predicated region
    $region78: #{msingi1_forward.1} parent=1 // pred_check
      _
    $region79: #{msingi1_forward.1} parent=1 // pred_check_branch
      %73 = sbr.rel (0) target = $region81
    $region80: #{msingi1_forward.1} parent=1 // pred_region
      _
    $region81: #{msingi1_forward.1} parent=1 // pred_fallthru
      _
    // Predicated region
    $region82: #{msingi1_forward.1} parent=1 // pred_check
      _
    $region83: #{msingi1_forward.1} parent=1 // pred_check_branch
      %75 = sbr.rel (0) target = $region85
    $region84: #{msingi1_forward.1} parent=1 // pred_region
      _
    $region85: #{msingi1_forward.1} parent=1 // pred_fallthru
      _
    // Predicated region
    $region86: #{msingi1_forward.1} parent=1 // pred_check
      _
    $region87: #{msingi1_forward.1} parent=1 // pred_check_branch
      %77 = sbr.rel (0) target = $region89
    $region88: #{msingi1_forward.1} parent=1 // pred_region
      _
    $region89: #{msingi1_forward.1} parent=1 // pred_fallthru
      _
    // Predicated region
    $region90: #{msingi1_forward.1} parent=1 // pred_check
      _
    $region91: #{msingi1_forward.1} parent=1 // pred_check_branch
      %79 = sbr.rel (0) target = $region93
    $region92: #{msingi1_forward.1} parent=1 // pred_region
      _
    $region93: #{msingi1_forward.1} parent=1 // pred_fallthru
      _
    // Predicated region
    $region94: #{msingi1_forward.1} parent=1 // pred_check
      _
    $region95: #{msingi1_forward.1} parent=1 // pred_check_branch
      %81 = sbr.rel (0) target = $region97
    $region96: #{msingi1_forward.1} parent=1 // pred_region
      _
    $region97: #{msingi1_forward.1} parent=1 // pred_fallthru
      _
    // Predicated region
    $region98: #{msingi1_forward.1} parent=1 // pred_check
      _
    $region99: #{msingi1_forward.1} parent=1 // pred_check_branch
      %83 = sbr.rel (0) target = $region101
    $region100: #{msingi1_forward.1} parent=1 // pred_region
      _
    $region101: #{msingi1_forward.1} parent=1 // pred_fallthru
      _
    // Predicated region
    $region102: #{msingi1_forward.1} parent=1 // pred_check
      _
    $region103: #{msingi1_forward.1} parent=1 // pred_check_branch
      %85 = sbr.rel (0) target = $region105
    $region104: #{msingi1_forward.1} parent=1 // pred_region
      _
    $region105: #{msingi1_forward.1} parent=1 // pred_fallthru
      _
    // Predicated region
    $region106: #{msingi1_forward.1} parent=1 // pred_check
      _
    $region107: #{msingi1_forward.1} parent=1 // pred_check_branch
      %87 = sbr.rel (0) target = $region109
    $region108: #{msingi1_forward.1} parent=1 // pred_region
      _
    $region109: #{msingi1_forward.1} parent=1 // pred_fallthru
      _
    // Predicated region
    $region110: #{msingi1_forward.1} parent=1 // pred_check
      _
    $region111: #{msingi1_forward.1} parent=1 // pred_check_branch
      %89 = sbr.rel (0) target = $region113
    $region112: #{msingi1_forward.1} parent=1 // pred_region
      _
    $region113: #{msingi1_forward.1} parent=1 // pred_fallthru
      _
    %v90 = vld [vmem:[%s0] sm:$0xff]
    %v91 = vld [vmem:[%s0 + $0x8] sm:$0xff]
    %v92 = vld [vmem:[%s1] sm:$0xff]
    %v93 = vld [vmem:[%s1 + $0x8] sm:$0xff]
    %v94 = vld [vmem:[%s2] sm:$0xff]
    %v95 = vld [vmem:[%s2 + $0x8] sm:$0xff]
    %v96 = vld [vmem:[%s3] sm:$0xff]
    %v97 = vld [vmem:[%s3 + $0x8] sm:$0xff]
    %v98 = vld [vmem:[%s4] sm:$0xf]
    %v99 = vld [vmem:[%s5] sm:$0x1]
    %v100 = vld [vmem:[%s6] sm:$0x1]
    %v101 = vld [vmem:[%s7] sm:$0xff]
    %v102 = vld [vmem:[%s7 + $0x8] sm:$0xff]
    %v103 = vld [vmem:[%s7 + $0x10] sm:$0xff]
    %v104 = vld [vmem:[%s7 + $0x18] sm:$0xff]
    %v105 = vld [vmem:[%s7 + $0x20] sm:$0xff]
    %v106 = vld [vmem:[%s7 + $0x28] sm:$0xff]
    %v107 = vld [vmem:[%s7 + $0x30] sm:$0xff]
    %v108 = vld [vmem:[%s7 + $0x38] sm:$0xff]
    %v109 = vld [vmem:[%s8] sm:$0xff]
    %v110 = vld [vmem:[%s8 + $0x8] sm:$0xff]
    %v111 = vld [vmem:[%s8 + $0x10] sm:$0xff]
    %v112 = vld [vmem:[%s8 + $0x18] sm:$0xff]
    %v113 = vld [vmem:[%s9] sm:$0x1]
    %v114 = vld [vmem:[%s10] sm:$0x1]
    %v115 = vld [vmem:[%s11] sm:$0xff]
    %v116 = vld [vmem:[%s11 + $0x8] sm:$0xff]
    %v117 = vld [vmem:[%s11 + $0x10] sm:$0xff]
    %v118 = vld [vmem:[%s11 + $0x18] sm:$0xff]
    %v119 = vld [vmem:[%s12] sm:$0x1]
    %v120 = vld [vmem:[%s13] sm:$0xff]
    %v121 = vld [vmem:[%s13 + $0x8] sm:$0xff]
    %v122 = vld [vmem:[%s13 + $0x10] sm:$0xff]
    %v123 = vld [vmem:[%s13 + $0x18] sm:$0xff]
    %v124 = vld [vmem:[%s13 + $0x20] sm:$0xff]
    %v125 = vld [vmem:[%s13 + $0x28] sm:$0xff]
    %v126 = vld [vmem:[%s13 + $0x30] sm:$0xff]
    %v127 = vld [vmem:[%s13 + $0x38] sm:$0xff]
    %v128 = vld [vmem:[%s14] sm:$0x1]
    %vm129 = vcmask 261120
    %v130 = vsel %vm129, %v90, 0.0
    %131 = vadd.xlane.f32.xlu0 %v130
    %v132 = vpop.xlane.xlu0 %131
    %v133 = vsel %vm129, %v91, 0.0
    %134 = vadd.xlane.f32.xlu0 %v133
    %v135 = vpop.xlane.xlu0 %134
    %v136 = vrcp.pop 32.0
    %v137 = vmul.f32 32.0, %v136
    %v138 = vsub.f32 1.0, %v137
    %v139 = vmul.f32 %v136, %v138
    %v140 = vadd.f32 %v136, %v139
    %vm141 = vweird.f32 %v136
    %v142 = vsel %vm141, %v136, %v140
    %v143 = vmul.f32 %v132, %v142
    %v144 = vmul.f32 %v135, %v142
    %v145 = vsub.f32 %v90, %v143
    %v146 = vsub.f32 %v91, %v144
    %v147 = vmul.f32 %v145, %v145
    %v148 = vmul.f32 %v146, %v146
    %v149 = vsel %vm129, %v147, 0.0
    %150 = vadd.xlane.f32.xlu0 %v149
    %v151 = vpop.xlane.xlu0 %150
    %v152 = vsel %vm129, %v148, 0.0
    %153 = vadd.xlane.f32.xlu0 %v152
    %v154 = vpop.xlane.xlu0 %153
    %v155 = vmul.f32 %v151, %v142
    %v156 = vmul.f32 %v154, %v142
    %v157 = vadd.f32 %v155, 1e-05
    %v158 = vadd.f32 %v156, 1e-05
    %v159 = vrsqrt.pop %v157
    %v160 = vmul.f32 %v159, %v157
    %v161 = vmul.f32 %v160, %v159
    %v162 = vmul.f32 0.5, %v161
    %v163 = vsub.f32 1.5, %v162
    %v164 = vmul.f32 %v159, %v163
    %vm165 = vweird.f32 %v157
    %vm166 = vweird.f32 %v159
    %vm167 = vmor %vm165, %vm166
    %v168 = vsel %vm167, %v159, %v164
    %v169 = vrsqrt.pop %v158
    %v170 = vmul.f32 %v169, %v158
    %v171 = vmul.f32 %v170, %v169
    %v172 = vmul.f32 0.5, %v171
    %v173 = vsub.f32 1.5, %v172
    %v174 = vmul.f32 %v169, %v173
    %vm175 = vweird.f32 %v158
    %vm176 = vweird.f32 %v169
    %vm177 = vmor %vm175, %vm176
    %v178 = vsel %vm177, %v169, %v174
    %v179 = vmul.f32 %v145, %v168
    %v180 = vmul.f32 %v146, %v178
    %v182 = vperm.slane %v99, 0
    %v184 = vmul.f32 %v179, %v182
    %v185 = vmul.f32 %v180, %v182
    %v187 = vperm.slane %v100, 0
    %v189 = vadd.f32 %v184, %v187
    %v190 = vadd.f32 %v185, %v187
    %v192 = vsel %vm129, %v189, 0
    %v195 = vsel %vm129, %v190, 0
    %197 = vmatpush.msra.mxu0 0.0
    %198 = vmatpush.msra.mxu0 0.0
    %199 = vmatpush.msra.mxu0 0.0
    %200 = vmatpush.msra.mxu0 0.0
    %201 = vmatpush.msra.mxu0 0.0
    %202 = vmatpush.msra.mxu0 0.0
    %203 = vmatpush.msra.mxu0 0.0
    %204 = vmatpush.msra.mxu0 0.0
    %205 = vmatpush.msra.mxu0 0.0
    %206 = vmatpush.msra.mxu0 0.0
    %207 = vmatpush.msra.mxu0 0.0
    %208 = vmatpush.msra.mxu0 0.0
    %209 = vmatpush.msra.mxu0 %v107
    %210 = vmatpush.msra.mxu0 %v105
    %211 = vmatpush.msra.mxu0 %v103
    %212 = vmatpush.msra.mxu0 %v101
    %213 = vmatmul.f32.gmra.mxu0 %v192
    %v214 = vpop.f32.mrf.mxu0
    %v215 = vadd.f32 0.0, %v214
    %216 = vmatmul.f32.gmra.mxu0 %v195
    %v217 = vpop.f32.mrf.mxu0
    %v218 = vadd.f32 0.0, %v217
    %219 = vdwg.mxu0
    %220 = vmatpush.msra.mxu0 0.0
    %221 = vmatpush.msra.mxu0 0.0
    %222 = vmatpush.msra.mxu0 0.0
    %223 = vmatpush.msra.mxu0 0.0
    %224 = vmatpush.msra.mxu0 0.0
    %225 = vmatpush.msra.mxu0 0.0
    %226 = vmatpush.msra.mxu0 0.0
    %227 = vmatpush.msra.mxu0 0.0
    %228 = vmatpush.msra.mxu0 0.0
    %229 = vmatpush.msra.mxu0 0.0
    %230 = vmatpush.msra.mxu0 0.0
    %231 = vmatpush.msra.mxu0 0.0
    %232 = vmatpush.msra.mxu0 %v108
    %233 = vmatpush.msra.mxu0 %v106
    %234 = vmatpush.msra.mxu0 %v104
    %235 = vmatpush.msra.mxu0 %v102
    %236 = vmatmul.f32.gmra.mxu0 %v192
    %v237 = vpop.f32.mrf.mxu0
    %v238 = vadd.f32 0.0, %v237
    %239 = vmatmul.f32.gmra.mxu0 %v195
    %v240 = vpop.f32.mrf.mxu0
    %v241 = vadd.f32 0.0, %v240
    %242 = vdwg.mxu0
    %v243 = vmul.f32 %v215, %v92
    %v244 = vmul.f32 %v218, %v93
    %247 = vrot.lane.b32.xlu0 %v94, 96
    %v248 = vpop.permute.xlu0 %247
    %249 = vrot.lane.b32.xlu0 %v95, 96
    %v250 = vpop.permute.xlu0 %249
    %v253 = vmul.f32 %v215, %v248
    %v254 = vmul.f32 %v218, %v250
    %257 = vrot.lane.b32.xlu0 %v253, 32
    %v258 = vpop.permute.xlu0 %257
    %259 = vrot.lane.b32.xlu0 %v254, 32
    %v260 = vpop.permute.xlu0 %259
    %v263 = vadd.f32 %v243, %v258
    %v264 = vadd.f32 %v244, %v260
    %267 = vrot.lane.b32.xlu0 %v92, 32
    %v268 = vpop.permute.xlu0 %267
    %269 = vrot.lane.b32.xlu0 %v93, 32
    %v270 = vpop.permute.xlu0 %269
    %v273 = vmul.f32 %v215, %v268
    %v274 = vmul.f32 %v218, %v270
    %v275 = vmul.f32 %v238, %v94
    %v276 = vmul.f32 %v241, %v95
    %279 = vrot.lane.b32.xlu0 %v275, 32
    %v280 = vpop.permute.xlu0 %279
    %281 = vrot.lane.b32.xlu0 %v276, 32
    %v282 = vpop.permute.xlu0 %281
    %v285 = vadd.f32 %v273, %v280
    %v286 = vadd.f32 %v274, %v282
    %v287 = vperm.slane %v98, 0
    %v288 = vmul.f32 %v263, %v287
    %v289 = vmul.f32 %v264, %v287
    %291 = vrot.lane.b32.xlu0 %v287, 64
    %v292 = vpop.permute.xlu0 %291
    %v294 = vmul.f32 %v215, %v292
    %v295 = vmul.f32 %v218, %v292
    %298 = vrot.lane.b32.xlu0 %v285, 96
    %v299 = vpop.permute.xlu0 %298
    %300 = vrot.lane.b32.xlu0 %v286, 96
    %v301 = vpop.permute.xlu0 %300
    %v303 = vsel %vm129, %v288, 0
    %v306 = vsel %vm129, %v289, 0
    %v308 = vsel %vm129, %v299, 0
    %v310 = vsel %vm129, %v301, 0
    %312 = vmatpush.xpose.msra.mxu0 0.0
    %313 = vmatpush.xpose.msra.mxu0 0.0
    %314 = vmatpush.xpose.msra.mxu0 0.0
    %315 = vmatpush.xpose.msra.mxu0 0.0
    %316 = vmatpush.xpose.msra.mxu0 0.0
    %317 = vmatpush.xpose.msra.mxu0 0.0
    %318 = vmatpush.xpose.msra.mxu0 0.0
    %319 = vmatpush.xpose.msra.mxu0 0.0
    %320 = vmatpush.xpose.msra.mxu0 0.0
    %321 = vmatpush.xpose.msra.mxu0 0.0
    %322 = vmatpush.xpose.msra.mxu0 0.0
    %323 = vmatpush.xpose.msra.mxu0 0.0
    %324 = vmatpush.xpose.msra.mxu0 0.0
    %325 = vmatpush.xpose.msra.mxu0 0.0
    %326 = vmatpush.xpose.msra.mxu0 %v310
    %327 = vmatpush.xpose.msra.mxu0 %v308
    %328 = vmatmul.f32.gmra.mxu0 %v303
    %v329 = vpop.f32.mrf.mxu0
    %v330 = vadd.f32 0.0, %v329
    %331 = vmatmul.f32.gmra.mxu0 %v306
    %v332 = vpop.f32.mrf.mxu0
    %v333 = vadd.f32 0.0, %v332
    %334 = vdwg.mxu0
    %v335 = vmul.f32 %v330, 0.35355338
    %v336 = vmul.f32 %v333, 0.35355338
    %v337 = vadd.f32 %v335, %v96
    %v338 = vadd.f32 %v336, %v97
    %vm339 = vcmask 130048
    %v340 = vsel %vm339, %v337, -inf
    %341 = vmax.xlane.f32.xlu0 %v340
    %v342 = vpop.xlane.xlu0 %341
    %v343 = vsel %vm339, %v338, -inf
    %344 = vmax.xlane.f32.xlu0 %v343
    %v345 = vpop.xlane.xlu0 %344
    %v346 = vsub.f32 %v337, %v342
    %v347 = vsub.f32 %v338, %v345
    %v348 = vmul.f32 %v346, 1.442695
    %v349 = vpow.pop %v348
    %v350 = vmul.f32 %v347, 1.442695
    %v351 = vpow.pop %v350
    %v352 = vsel %vm339, %v349, 0.0
    %353 = vadd.xlane.f32.xlu0 %v352
    %v354 = vpop.xlane.xlu0 %353
    %v355 = vsel %vm339, %v351, 0.0
    %356 = vadd.xlane.f32.xlu0 %v355
    %v357 = vpop.xlane.xlu0 %356
    %v358 = vrcp.pop %v354
    %v359 = vmul.f32 %v354, %v358
    %v360 = vsub.f32 1.0, %v359
    %v361 = vmul.f32 %v358, %v360
    %v362 = vadd.f32 %v358, %v361
    %vm363 = vweird.f32 %v354
    %vm364 = vweird.f32 %v358
    %vm365 = vmor %vm363, %vm364
    %v366 = vsel %vm365, %v358, %v362
    %v367 = vand.u32 2147483647, %v354
    %vm368 = vcmp.eq.f32.partialorder %v367, 8.507059e+37
    %v369 = vand.u32 %v354, 2147483648
    %v370 = vor.u32 1.1754944e-38, %v369
    %v371 = vsel %vm368, %v370, %v366
    %v372 = vmul.f32 %v349, %v371
    %v373 = vrcp.pop %v357
    %v374 = vmul.f32 %v357, %v373
    %v375 = vsub.f32 1.0, %v374
    %v376 = vmul.f32 %v373, %v375
    %v377 = vadd.f32 %v373, %v376
    %vm378 = vweird.f32 %v357
    %vm379 = vweird.f32 %v373
    %vm380 = vmor %vm378, %vm379
    %v381 = vsel %vm380, %v373, %v377
    %v382 = vand.u32 2147483647, %v357
    %vm383 = vcmp.eq.f32.partialorder %v382, 8.507059e+37
    %v384 = vand.u32 %v357, 2147483648
    %v385 = vor.u32 1.1754944e-38, %v384
    %v386 = vsel %vm383, %v385, %v381
    %v387 = vmul.f32 %v351, %v386
    %v388 = vperm.slane %v98, 1
    %v389 = vmul.f32 %v263, %v388
    %v390 = vmul.f32 %v264, %v388
    %392 = vrot.lane.b32.xlu0 %v388, 64
    %v393 = vpop.permute.xlu0 %392
    %v395 = vmul.f32 %v215, %v393
    %v396 = vmul.f32 %v218, %v393
    %v398 = vsel %vm129, %v389, 0
    %v401 = vsel %vm129, %v390, 0
    %403 = vmatpush.xpose.msra.mxu0 0.0
    %404 = vmatpush.xpose.msra.mxu0 0.0
    %405 = vmatpush.xpose.msra.mxu0 0.0
    %406 = vmatpush.xpose.msra.mxu0 0.0
    %407 = vmatpush.xpose.msra.mxu0 0.0
    %408 = vmatpush.xpose.msra.mxu0 0.0
    %409 = vmatpush.xpose.msra.mxu0 0.0
    %410 = vmatpush.xpose.msra.mxu0 0.0
    %411 = vmatpush.xpose.msra.mxu0 0.0
    %412 = vmatpush.xpose.msra.mxu0 0.0
    %413 = vmatpush.xpose.msra.mxu0 0.0
    %414 = vmatpush.xpose.msra.mxu0 0.0
    %415 = vmatpush.xpose.msra.mxu0 0.0
    %416 = vmatpush.xpose.msra.mxu0 0.0
    %417 = vmatpush.xpose.msra.mxu0 %v310
    %418 = vmatpush.xpose.msra.mxu0 %v308
    %419 = vmatmul.f32.gmra.mxu0 %v398
    %v420 = vpop.f32.mrf.mxu0
    %v421 = vadd.f32 0.0, %v420
    %422 = vmatmul.f32.gmra.mxu0 %v401
    %v423 = vpop.f32.mrf.mxu0
    %v424 = vadd.f32 0.0, %v423
    %425 = vdwg.mxu0
    %v426 = vmul.f32 %v421, 0.35355338
    %v427 = vmul.f32 %v424, 0.35355338
    %v428 = vadd.f32 %v426, %v96
    %v429 = vadd.f32 %v427, %v97
    %v430 = vsel %vm339, %v428, -inf
    %431 = vmax.xlane.f32.xlu0 %v430
    %v432 = vpop.xlane.xlu0 %431
    %v433 = vsel %vm339, %v429, -inf
    %434 = vmax.xlane.f32.xlu0 %v433
    %v435 = vpop.xlane.xlu0 %434
    %v436 = vsub.f32 %v428, %v432
    %v437 = vsub.f32 %v429, %v435
    %v438 = vmul.f32 %v436, 1.442695
    %v439 = vpow.pop %v438
    %v440 = vmul.f32 %v437, 1.442695
    %v441 = vpow.pop %v440
    %v442 = vsel %vm339, %v439, 0.0
    %443 = vadd.xlane.f32.xlu0 %v442
    %v444 = vpop.xlane.xlu0 %443
    %v445 = vsel %vm339, %v441, 0.0
    %446 = vadd.xlane.f32.xlu0 %v445
    %v447 = vpop.xlane.xlu0 %446
    %v448 = vrcp.pop %v444
    %v449 = vmul.f32 %v444, %v448
    %v450 = vsub.f32 1.0, %v449
    %v451 = vmul.f32 %v448, %v450
    %v452 = vadd.f32 %v448, %v451
    %vm453 = vweird.f32 %v444
    %vm454 = vweird.f32 %v448
    %vm455 = vmor %vm453, %vm454
    %v456 = vsel %vm455, %v448, %v452
    %v457 = vand.u32 2147483647, %v444
    %vm458 = vcmp.eq.f32.partialorder %v457, 8.507059e+37
    %v459 = vand.u32 %v444, 2147483648
    %v460 = vor.u32 1.1754944e-38, %v459
    %v461 = vsel %vm458, %v460, %v456
    %v462 = vmul.f32 %v439, %v461
    %v463 = vrcp.pop %v447
    %v464 = vmul.f32 %v447, %v463
    %v465 = vsub.f32 1.0, %v464
    %v466 = vmul.f32 %v463, %v465
    %v467 = vadd.f32 %v463, %v466
    %vm468 = vweird.f32 %v447
    %vm469 = vweird.f32 %v463
    %vm470 = vmor %vm468, %vm469
    %v471 = vsel %vm470, %v463, %v467
    %v472 = vand.u32 2147483647, %v447
    %vm473 = vcmp.eq.f32.partialorder %v472, 8.507059e+37
    %v474 = vand.u32 %v447, 2147483648
    %v475 = vor.u32 1.1754944e-38, %v474
    %v476 = vsel %vm473, %v475, %v471
    %v477 = vmul.f32 %v441, %v476
    %480 = vrot.lane.b32.xlu0 %v395, 64
    %v481 = vpop.permute.xlu0 %480
    %482 = vrot.lane.b32.xlu0 %v396, 64
    %v483 = vpop.permute.xlu0 %482
    %v487 = vsel %vm339, %v462, 0
    %v490 = vsel %vm339, %v477, 0
    %492 = vmatpush.msra.mxu0 0.0
    %493 = vmatpush.msra.mxu0 0.0
    %494 = vmatpush.msra.mxu0 0.0
    %495 = vmatpush.msra.mxu0 0.0
    %496 = vmatpush.msra.mxu0 0.0
    %497 = vmatpush.msra.mxu0 0.0
    %498 = vmatpush.msra.mxu0 0.0
    %499 = vmatpush.msra.mxu0 0.0
    %500 = vmatpush.msra.mxu0 0.0
    %501 = vmatpush.msra.mxu0 0.0
    %502 = vmatpush.msra.mxu0 0.0
    %503 = vmatpush.msra.mxu0 0.0
    %504 = vmatpush.msra.mxu0 0.0
    %505 = vmatpush.msra.mxu0 0.0
    %506 = vmatpush.msra.mxu0 %v483
    %507 = vmatpush.msra.mxu0 %v481
    %508 = vmatmul.f32.gmra.mxu0 %v487
    %v509 = vpop.f32.mrf.mxu0
    %v510 = vadd.f32 0.0, %v509
    %511 = vmatmul.f32.gmra.mxu0 %v490
    %v512 = vpop.f32.mrf.mxu0
    %v513 = vadd.f32 0.0, %v512
    %514 = vdwg.mxu0
    %517 = vrot.lane.b32.xlu0 %v294, 64
    %v518 = vpop.permute.xlu0 %517
    %519 = vrot.lane.b32.xlu0 %v295, 64
    %v520 = vpop.permute.xlu0 %519
    %v524 = vsel %vm339, %v372, 0
    %v527 = vsel %vm339, %v387, 0
    %529 = vmatpush.msra.mxu0 0.0
    %530 = vmatpush.msra.mxu0 0.0
    %531 = vmatpush.msra.mxu0 0.0
    %532 = vmatpush.msra.mxu0 0.0
    %533 = vmatpush.msra.mxu0 0.0
    %534 = vmatpush.msra.mxu0 0.0
    %535 = vmatpush.msra.mxu0 0.0
    %536 = vmatpush.msra.mxu0 0.0
    %537 = vmatpush.msra.mxu0 0.0
    %538 = vmatpush.msra.mxu0 0.0
    %539 = vmatpush.msra.mxu0 0.0
    %540 = vmatpush.msra.mxu0 0.0
    %541 = vmatpush.msra.mxu0 0.0
    %542 = vmatpush.msra.mxu0 0.0
    %543 = vmatpush.msra.mxu0 %v520
    %544 = vmatpush.msra.mxu0 %v518
    %545 = vmatmul.f32.gmra.mxu0 %v524
    %v546 = vpop.f32.mrf.mxu0
    %v547 = vadd.f32 %v510, %v546
    %548 = vmatmul.f32.gmra.mxu0 %v527
    %v549 = vpop.f32.mrf.mxu0
    %v550 = vadd.f32 %v513, %v549
    %551 = vdwg.mxu0
    %v552 = vperm.slane %v98, 2
    %v553 = vmul.f32 %v263, %v552
    %v554 = vmul.f32 %v264, %v552
    %556 = vrot.lane.b32.xlu0 %v552, 64
    %v557 = vpop.permute.xlu0 %556
    %v559 = vmul.f32 %v215, %v557
    %v560 = vmul.f32 %v218, %v557
    %v562 = vsel %vm129, %v553, 0
    %v565 = vsel %vm129, %v554, 0
    %567 = vmatpush.xpose.msra.mxu0 0.0
    %568 = vmatpush.xpose.msra.mxu0 0.0
    %569 = vmatpush.xpose.msra.mxu0 0.0
    %570 = vmatpush.xpose.msra.mxu0 0.0
    %571 = vmatpush.xpose.msra.mxu0 0.0
    %572 = vmatpush.xpose.msra.mxu0 0.0
    %573 = vmatpush.xpose.msra.mxu0 0.0
    %574 = vmatpush.xpose.msra.mxu0 0.0
    %575 = vmatpush.xpose.msra.mxu0 0.0
    %576 = vmatpush.xpose.msra.mxu0 0.0
    %577 = vmatpush.xpose.msra.mxu0 0.0
    %578 = vmatpush.xpose.msra.mxu0 0.0
    %579 = vmatpush.xpose.msra.mxu0 0.0
    %580 = vmatpush.xpose.msra.mxu0 0.0
    %581 = vmatpush.xpose.msra.mxu0 %v310
    %582 = vmatpush.xpose.msra.mxu0 %v308
    %583 = vmatmul.f32.gmra.mxu0 %v562
    %v584 = vpop.f32.mrf.mxu0
    %v585 = vadd.f32 0.0, %v584
    %586 = vmatmul.f32.gmra.mxu0 %v565
    %v587 = vpop.f32.mrf.mxu0
    %v588 = vadd.f32 0.0, %v587
    %589 = vdwg.mxu0
    %v590 = vmul.f32 %v585, 0.35355338
    %v591 = vmul.f32 %v588, 0.35355338
    %v592 = vadd.f32 %v590, %v96
    %v593 = vadd.f32 %v591, %v97
    %v594 = vsel %vm339, %v592, -inf
    %595 = vmax.xlane.f32.xlu0 %v594
    %v596 = vpop.xlane.xlu0 %595
    %v597 = vsel %vm339, %v593, -inf
    %598 = vmax.xlane.f32.xlu0 %v597
    %v599 = vpop.xlane.xlu0 %598
    %v600 = vsub.f32 %v592, %v596
    %v601 = vsub.f32 %v593, %v599
    %v602 = vmul.f32 %v600, 1.442695
    %v603 = vpow.pop %v602
    %v604 = vmul.f32 %v601, 1.442695
    %v605 = vpow.pop %v604
    %v606 = vsel %vm339, %v603, 0.0
    %607 = vadd.xlane.f32.xlu0 %v606
    %v608 = vpop.xlane.xlu0 %607
    %v609 = vsel %vm339, %v605, 0.0
    %610 = vadd.xlane.f32.xlu0 %v609
    %v611 = vpop.xlane.xlu0 %610
    %v612 = vrcp.pop %v608
    %v613 = vmul.f32 %v608, %v612
    %v614 = vsub.f32 1.0, %v613
    %v615 = vmul.f32 %v612, %v614
    %v616 = vadd.f32 %v612, %v615
    %vm617 = vweird.f32 %v608
    %vm618 = vweird.f32 %v612
    %vm619 = vmor %vm617, %vm618
    %v620 = vsel %vm619, %v612, %v616
    %v621 = vand.u32 2147483647, %v608
    %vm622 = vcmp.eq.f32.partialorder %v621, 8.507059e+37
    %v623 = vand.u32 %v608, 2147483648
    %v624 = vor.u32 1.1754944e-38, %v623
    %v625 = vsel %vm622, %v624, %v620
    %v626 = vmul.f32 %v603, %v625
    %v627 = vrcp.pop %v611
    %v628 = vmul.f32 %v611, %v627
    %v629 = vsub.f32 1.0, %v628
    %v630 = vmul.f32 %v627, %v629
    %v631 = vadd.f32 %v627, %v630
    %vm632 = vweird.f32 %v611
    %vm633 = vweird.f32 %v627
    %vm634 = vmor %vm632, %vm633
    %v635 = vsel %vm634, %v627, %v631
    %v636 = vand.u32 2147483647, %v611
    %vm637 = vcmp.eq.f32.partialorder %v636, 8.507059e+37
    %v638 = vand.u32 %v611, 2147483648
    %v639 = vor.u32 1.1754944e-38, %v638
    %v640 = vsel %vm637, %v639, %v635
    %v641 = vmul.f32 %v605, %v640
    %644 = vrot.lane.b32.xlu0 %v559, 64
    %v645 = vpop.permute.xlu0 %644
    %646 = vrot.lane.b32.xlu0 %v560, 64
    %v647 = vpop.permute.xlu0 %646
    %v651 = vsel %vm339, %v626, 0
    %v654 = vsel %vm339, %v641, 0
    %656 = vmatpush.msra.mxu0 0.0
    %657 = vmatpush.msra.mxu0 0.0
    %658 = vmatpush.msra.mxu0 0.0
    %659 = vmatpush.msra.mxu0 0.0
    %660 = vmatpush.msra.mxu0 0.0
    %661 = vmatpush.msra.mxu0 0.0
    %662 = vmatpush.msra.mxu0 0.0
    %663 = vmatpush.msra.mxu0 0.0
    %664 = vmatpush.msra.mxu0 0.0
    %665 = vmatpush.msra.mxu0 0.0
    %666 = vmatpush.msra.mxu0 0.0
    %667 = vmatpush.msra.mxu0 0.0
    %668 = vmatpush.msra.mxu0 0.0
    %669 = vmatpush.msra.mxu0 0.0
    %670 = vmatpush.msra.mxu0 %v647
    %671 = vmatpush.msra.mxu0 %v645
    %672 = vmatmul.f32.gmra.mxu0 %v651
    %v673 = vpop.f32.mrf.mxu0
    %v674 = vadd.f32 0.0, %v673
    %675 = vmatmul.f32.gmra.mxu0 %v654
    %v676 = vpop.f32.mrf.mxu0
    %v677 = vadd.f32 0.0, %v676
    %678 = vdwg.mxu0
    %v679 = vadd.f32 %v547, %v674
    %v680 = vadd.f32 %v550, %v677
    %v681 = vperm.slane %v98, 3
    %v682 = vmul.f32 %v263, %v681
    %v683 = vmul.f32 %v264, %v681
    %685 = vrot.lane.b32.xlu0 %v681, 64
    %v686 = vpop.permute.xlu0 %685
    %v688 = vmul.f32 %v215, %v686
    %v689 = vmul.f32 %v218, %v686
    %v691 = vsel %vm129, %v682, 0
    %v694 = vsel %vm129, %v683, 0
    %696 = vmatpush.xpose.msra.mxu0 0.0
    %697 = vmatpush.xpose.msra.mxu0 0.0
    %698 = vmatpush.xpose.msra.mxu0 0.0
    %699 = vmatpush.xpose.msra.mxu0 0.0
    %700 = vmatpush.xpose.msra.mxu0 0.0
    %701 = vmatpush.xpose.msra.mxu0 0.0
    %702 = vmatpush.xpose.msra.mxu0 0.0
    %703 = vmatpush.xpose.msra.mxu0 0.0
    %704 = vmatpush.xpose.msra.mxu0 0.0
    %705 = vmatpush.xpose.msra.mxu0 0.0
    %706 = vmatpush.xpose.msra.mxu0 0.0
    %707 = vmatpush.xpose.msra.mxu0 0.0
    %708 = vmatpush.xpose.msra.mxu0 0.0
    %709 = vmatpush.xpose.msra.mxu0 0.0
    %710 = vmatpush.xpose.msra.mxu0 %v310
    %711 = vmatpush.xpose.msra.mxu0 %v308
    %712 = vmatmul.f32.gmra.mxu0 %v691
    %v713 = vpop.f32.mrf.mxu0
    %v714 = vadd.f32 0.0, %v713
    %715 = vmatmul.f32.gmra.mxu0 %v694
    %v716 = vpop.f32.mrf.mxu0
    %v717 = vadd.f32 0.0, %v716
    %718 = vdwg.mxu0
    %v719 = vmul.f32 %v714, 0.35355338
    %v720 = vmul.f32 %v717, 0.35355338
    %v721 = vadd.f32 %v719, %v96
    %v722 = vadd.f32 %v720, %v97
    %v723 = vsel %vm339, %v721, -inf
    %724 = vmax.xlane.f32.xlu0 %v723
    %v725 = vpop.xlane.xlu0 %724
    %v726 = vsel %vm339, %v722, -inf
    %727 = vmax.xlane.f32.xlu0 %v726
    %v728 = vpop.xlane.xlu0 %727
    %v729 = vsub.f32 %v721, %v725
    %v730 = vsub.f32 %v722, %v728
    %v731 = vmul.f32 %v729, 1.442695
    %v732 = vpow.pop %v731
    %v733 = vmul.f32 %v730, 1.442695
    %v734 = vpow.pop %v733
    %v735 = vsel %vm339, %v732, 0.0
    %736 = vadd.xlane.f32.xlu0 %v735
    %v737 = vpop.xlane.xlu0 %736
    %v738 = vsel %vm339, %v734, 0.0
    %739 = vadd.xlane.f32.xlu0 %v738
    %v740 = vpop.xlane.xlu0 %739
    %v741 = vrcp.pop %v737
    %v742 = vmul.f32 %v737, %v741
    %v743 = vsub.f32 1.0, %v742
    %v744 = vmul.f32 %v741, %v743
    %v745 = vadd.f32 %v741, %v744
    %vm746 = vweird.f32 %v737
    %vm747 = vweird.f32 %v741
    %vm748 = vmor %vm746, %vm747
    %v749 = vsel %vm748, %v741, %v745
    %v750 = vand.u32 2147483647, %v737
    %vm751 = vcmp.eq.f32.partialorder %v750, 8.507059e+37
    %v752 = vand.u32 %v737, 2147483648
    %v753 = vor.u32 1.1754944e-38, %v752
    %v754 = vsel %vm751, %v753, %v749
    %v755 = vmul.f32 %v732, %v754
    %v756 = vrcp.pop %v740
    %v757 = vmul.f32 %v740, %v756
    %v758 = vsub.f32 1.0, %v757
    %v759 = vmul.f32 %v756, %v758
    %v760 = vadd.f32 %v756, %v759
    %vm761 = vweird.f32 %v740
    %vm762 = vweird.f32 %v756
    %vm763 = vmor %vm761, %vm762
    %v764 = vsel %vm763, %v756, %v760
    %v765 = vand.u32 2147483647, %v740
    %vm766 = vcmp.eq.f32.partialorder %v765, 8.507059e+37
    %v767 = vand.u32 %v740, 2147483648
    %v768 = vor.u32 1.1754944e-38, %v767
    %v769 = vsel %vm766, %v768, %v764
    %v770 = vmul.f32 %v734, %v769
    %773 = vrot.lane.b32.xlu0 %v688, 64
    %v774 = vpop.permute.xlu0 %773
    %775 = vrot.lane.b32.xlu0 %v689, 64
    %v776 = vpop.permute.xlu0 %775
    %v780 = vsel %vm339, %v755, 0
    %v783 = vsel %vm339, %v770, 0
    %785 = vmatpush.msra.mxu0 0.0
    %786 = vmatpush.msra.mxu0 0.0
    %787 = vmatpush.msra.mxu0 0.0
    %788 = vmatpush.msra.mxu0 0.0
    %789 = vmatpush.msra.mxu0 0.0
    %790 = vmatpush.msra.mxu0 0.0
    %791 = vmatpush.msra.mxu0 0.0
    %792 = vmatpush.msra.mxu0 0.0
    %793 = vmatpush.msra.mxu0 0.0
    %794 = vmatpush.msra.mxu0 0.0
    %795 = vmatpush.msra.mxu0 0.0
    %796 = vmatpush.msra.mxu0 0.0
    %797 = vmatpush.msra.mxu0 0.0
    %798 = vmatpush.msra.mxu0 0.0
    %799 = vmatpush.msra.mxu0 %v776
    %800 = vmatpush.msra.mxu0 %v774
    %801 = vmatmul.f32.gmra.mxu0 %v780
    %v802 = vpop.f32.mrf.mxu0
    %v803 = vadd.f32 0.0, %v802
    %804 = vmatmul.f32.gmra.mxu0 %v783
    %v805 = vpop.f32.mrf.mxu0
    %v806 = vadd.f32 0.0, %v805
    %807 = vdwg.mxu0
    %v808 = vadd.f32 %v679, %v803
    %v809 = vadd.f32 %v680, %v806
    %v811 = vsel %vm129, %v808, 0
    %v814 = vsel %vm129, %v809, 0
    %816 = vmatpush.msra.mxu0 0.0
    %817 = vmatpush.msra.mxu0 0.0
    %818 = vmatpush.msra.mxu0 0.0
    %819 = vmatpush.msra.mxu0 0.0
    %820 = vmatpush.msra.mxu0 0.0
    %821 = vmatpush.msra.mxu0 0.0
    %822 = vmatpush.msra.mxu0 0.0
    %823 = vmatpush.msra.mxu0 0.0
    %824 = vmatpush.msra.mxu0 0.0
    %825 = vmatpush.msra.mxu0 0.0
    %826 = vmatpush.msra.mxu0 0.0
    %827 = vmatpush.msra.mxu0 0.0
    %828 = vmatpush.msra.mxu0 %v112
    %829 = vmatpush.msra.mxu0 %v111
    %830 = vmatpush.msra.mxu0 %v110
    %831 = vmatpush.msra.mxu0 %v109
    %832 = vmatmul.f32.gmra.mxu0 %v811
    %v833 = vpop.f32.mrf.mxu0
    %v834 = vadd.f32 0.0, %v833
    %835 = vmatmul.f32.gmra.mxu0 %v814
    %v836 = vpop.f32.mrf.mxu0
    %v837 = vadd.f32 0.0, %v836
    %838 = vdwg.mxu0
    %v839 = vadd.f32 %v90, %v834
    %v840 = vadd.f32 %v91, %v837
    %v841 = vsel %vm129, %v839, 0.0
    %842 = vadd.xlane.f32.xlu0 %v841
    %v843 = vpop.xlane.xlu0 %842
    %v844 = vsel %vm129, %v840, 0.0
    %845 = vadd.xlane.f32.xlu0 %v844
    %v846 = vpop.xlane.xlu0 %845
    %v847 = vmul.f32 %v843, %v142
    %v848 = vmul.f32 %v846, %v142
    %v849 = vsub.f32 %v839, %v847
    %v850 = vsub.f32 %v840, %v848
    %v851 = vmul.f32 %v849, %v849
    %v852 = vmul.f32 %v850, %v850
    %v853 = vsel %vm129, %v851, 0.0
    %854 = vadd.xlane.f32.xlu0 %v853
    %v855 = vpop.xlane.xlu0 %854
    %v856 = vsel %vm129, %v852, 0.0
    %857 = vadd.xlane.f32.xlu0 %v856
    %v858 = vpop.xlane.xlu0 %857
    %v859 = vmul.f32 %v855, %v142
    %v860 = vmul.f32 %v858, %v142
    %v861 = vadd.f32 %v859, 1e-05
    %v862 = vadd.f32 %v860, 1e-05
    %v863 = vrsqrt.pop %v861
    %v864 = vmul.f32 %v863, %v861
    %v865 = vmul.f32 %v864, %v863
    %v866 = vmul.f32 0.5, %v865
    %v867 = vsub.f32 1.5, %v866
    %v868 = vmul.f32 %v863, %v867
    %vm869 = vweird.f32 %v861
    %vm870 = vweird.f32 %v863
    %vm871 = vmor %vm869, %vm870
    %v872 = vsel %vm871, %v863, %v868
    %v873 = vrsqrt.pop %v862
    %v874 = vmul.f32 %v873, %v862
    %v875 = vmul.f32 %v874, %v873
    %v876 = vmul.f32 0.5, %v875
    %v877 = vsub.f32 1.5, %v876
    %v878 = vmul.f32 %v873, %v877
    %vm879 = vweird.f32 %v862
    %vm880 = vweird.f32 %v873
    %vm881 = vmor %vm879, %vm880
    %v882 = vsel %vm881, %v873, %v878
    %v883 = vmul.f32 %v849, %v872
    %v884 = vmul.f32 %v850, %v882
    %v886 = vperm.slane %v113, 0
    %v888 = vmul.f32 %v883, %v886
    %v889 = vmul.f32 %v884, %v886
    %v891 = vperm.slane %v114, 0
    %v893 = vadd.f32 %v888, %v891
    %v894 = vadd.f32 %v889, %v891
    %v896 = vperm.slane %v119, 0
    %v899 = vsel %vm129, %v893, 0
    %v902 = vsel %vm129, %v894, 0
    %904 = vmatpush.msra.mxu0 0.0
    %905 = vmatpush.msra.mxu0 0.0
    %906 = vmatpush.msra.mxu0 0.0
    %907 = vmatpush.msra.mxu0 0.0
    %908 = vmatpush.msra.mxu0 0.0
    %909 = vmatpush.msra.mxu0 0.0
    %910 = vmatpush.msra.mxu0 0.0
    %911 = vmatpush.msra.mxu0 0.0
    %912 = vmatpush.msra.mxu0 0.0
    %913 = vmatpush.msra.mxu0 0.0
    %914 = vmatpush.msra.mxu0 0.0
    %915 = vmatpush.msra.mxu0 0.0
    %916 = vmatpush.msra.mxu0 %v118
    %917 = vmatpush.msra.mxu0 %v117
    %918 = vmatpush.msra.mxu0 %v116
    %919 = vmatpush.msra.mxu0 %v115
    %920 = vmatmul.f32.gmra.mxu0 %v899
    %v921 = vpop.f32.mrf.mxu0
    %v922 = vadd.f32 %v896, %v921
    %923 = vmatmul.f32.gmra.mxu0 %v902
    %v924 = vpop.f32.mrf.mxu0
    %v925 = vadd.f32 %v896, %v924
    %926 = vdwg.mxu0
    %v927 = vmul.f32 %v922, %v922
    %v928 = vmul.f32 %v925, %v925
    %v929 = vmul.f32 %v922, %v927
    %v930 = vmul.f32 %v925, %v928
    %v931 = vmul.f32 %v929, 0.044715
    %v932 = vmul.f32 %v930, 0.044715
    %v933 = vadd.f32 %v922, %v931
    %v934 = vadd.f32 %v925, %v932
    %v935 = vmul.f32 %v933, 0.7978846
    %v936 = vmul.f32 %v934, 0.7978846
    %v937 = vtanh.pop %v935
    %v938 = vtanh.pop %v936
    %v939 = vadd.f32 %v937, 1.0
    %v940 = vadd.f32 %v938, 1.0
    %v941 = vmul.f32 %v939, 0.5
    %v942 = vmul.f32 %v940, 0.5
    %v943 = vmul.f32 %v922, %v941
    %v944 = vmul.f32 %v925, %v942
    %vm945 = vcmask 523264
    %v947 = vsel %vm945, %v943, 0
    %v950 = vsel %vm945, %v944, 0
    %952 = vmatpush.msra.mxu0 0.0
    %953 = vmatpush.msra.mxu0 0.0
    %954 = vmatpush.msra.mxu0 0.0
    %955 = vmatpush.msra.mxu0 0.0
    %956 = vmatpush.msra.mxu0 0.0
    %957 = vmatpush.msra.mxu0 0.0
    %958 = vmatpush.msra.mxu0 0.0
    %959 = vmatpush.msra.mxu0 0.0
    %960 = vmatpush.msra.mxu0 %v127
    %961 = vmatpush.msra.mxu0 %v126
    %962 = vmatpush.msra.mxu0 %v125
    %963 = vmatpush.msra.mxu0 %v124
    %964 = vmatpush.msra.mxu0 %v123
    %965 = vmatpush.msra.mxu0 %v122
    %966 = vmatpush.msra.mxu0 %v121
    %967 = vmatpush.msra.mxu0 %v120
    %968 = vmatmul.f32.gmra.mxu0 %v947
    %v969 = vpop.f32.mrf.mxu0
    %v970 = vadd.f32 0.0, %v969
    %971 = vmatmul.f32.gmra.mxu0 %v950
    %v972 = vpop.f32.mrf.mxu0
    %v973 = vadd.f32 0.0, %v972
    %974 = vdwg.mxu0
    %v975 = vadd.f32 %v839, %v970
    %v976 = vadd.f32 %v840, %v973
    %v978 = vperm.slane %v128, 0
    %v980 = vadd.f32 %v975, %v978
    %v981 = vadd.f32 %v976, %v978
    %v982 = vld [vmem:[%s15] sm:$0x1]
    %v983 = vld [vmem:[%s16] sm:$0x1]
    %v984 = vld [vmem:[%s17] sm:$0xff]
    %v985 = vld [vmem:[%s17 + $0x8] sm:$0xff]
    %v986 = vld [vmem:[%s17 + $0x10] sm:$0xff]
    %v987 = vld [vmem:[%s17 + $0x18] sm:$0xff]
    %v988 = vld [vmem:[%s17 + $0x20] sm:$0xff]
    %v989 = vld [vmem:[%s17 + $0x28] sm:$0xff]
    %v990 = vld [vmem:[%s17 + $0x30] sm:$0xff]
    %v991 = vld [vmem:[%s17 + $0x38] sm:$0xff]
    %v992 = vld [vmem:[%s18] sm:$0xff]
    %v993 = vld [vmem:[%s18 + $0x8] sm:$0xff]
    %v994 = vld [vmem:[%s18 + $0x10] sm:$0xff]
    %v995 = vld [vmem:[%s18 + $0x18] sm:$0xff]
    %v996 = vld [vmem:[%s19] sm:$0x1]
    %v997 = vld [vmem:[%s20] sm:$0x1]
    %v998 = vld [vmem:[%s21] sm:$0xff]
    %v999 = vld [vmem:[%s21 + $0x8] sm:$0xff]
    %v1000 = vld [vmem:[%s21 + $0x10] sm:$0xff]
    %v1001 = vld [vmem:[%s21 + $0x18] sm:$0xff]
    %v1002 = vld [vmem:[%s22] sm:$0x1]
    %v1003 = vld [vmem:[%s23] sm:$0xff]
    %v1004 = vld [vmem:[%s23 + $0x8] sm:$0xff]
    %v1005 = vld [vmem:[%s23 + $0x10] sm:$0xff]
    %v1006 = vld [vmem:[%s23 + $0x18] sm:$0xff]
    %v1007 = vld [vmem:[%s23 + $0x20] sm:$0xff]
    %v1008 = vld [vmem:[%s23 + $0x28] sm:$0xff]
    %v1009 = vld [vmem:[%s23 + $0x30] sm:$0xff]
    %v1010 = vld [vmem:[%s23 + $0x38] sm:$0xff]
    %v1011 = vld [vmem:[%s24] sm:$0x1]
    %v1012 = vsel %vm129, %v980, 0.0
    %1013 = vadd.xlane.f32.xlu0 %v1012
    %v1014 = vpop.xlane.xlu0 %1013
    %v1015 = vsel %vm129, %v981, 0.0
    %1016 = vadd.xlane.f32.xlu0 %v1015
    %v1017 = vpop.xlane.xlu0 %1016
    %v1018 = vmul.f32 %v1014, %v142
    %v1019 = vmul.f32 %v1017, %v142
    %v1020 = vsub.f32 %v980, %v1018
    %v1021 = vsub.f32 %v981, %v1019
    %v1022 = vmul.f32 %v1020, %v1020
    %v1023 = vmul.f32 %v1021, %v1021
    %v1024 = vsel %vm129, %v1022, 0.0
    %1025 = vadd.xlane.f32.xlu0 %v1024
    %v1026 = vpop.xlane.xlu0 %1025
    %v1027 = vsel %vm129, %v1023, 0.0
    %1028 = vadd.xlane.f32.xlu0 %v1027
    %v1029 = vpop.xlane.xlu0 %1028
    %v1030 = vmul.f32 %v1026, %v142
    %v1031 = vmul.f32 %v1029, %v142
    %v1032 = vadd.f32 %v1030, 1e-05
    %v1033 = vadd.f32 %v1031, 1e-05
    %v1034 = vrsqrt.pop %v1032
    %v1035 = vmul.f32 %v1034, %v1032
    %v1036 = vmul.f32 %v1035, %v1034
    %v1037 = vmul.f32 0.5, %v1036
    %v1038 = vsub.f32 1.5, %v1037
    %v1039 = vmul.f32 %v1034, %v1038
    %vm1040 = vweird.f32 %v1032
    %vm1041 = vweird.f32 %v1034
    %vm1042 = vmor %vm1040, %vm1041
    %v1043 = vsel %vm1042, %v1034, %v1039
    %v1044 = vrsqrt.pop %v1033
    %v1045 = vmul.f32 %v1044, %v1033
    %v1046 = vmul.f32 %v1045, %v1044
    %v1047 = vmul.f32 0.5, %v1046
    %v1048 = vsub.f32 1.5, %v1047
    %v1049 = vmul.f32 %v1044, %v1048
    %vm1050 = vweird.f32 %v1033
    %vm1051 = vweird.f32 %v1044
    %vm1052 = vmor %vm1050, %vm1051
    %v1053 = vsel %vm1052, %v1044, %v1049
    %v1054 = vmul.f32 %v1020, %v1043
    %v1055 = vmul.f32 %v1021, %v1053
    %v1057 = vperm.slane %v982, 0
    %v1059 = vmul.f32 %v1054, %v1057
    %v1060 = vmul.f32 %v1055, %v1057
    %v1062 = vperm.slane %v983, 0
    %v1064 = vadd.f32 %v1059, %v1062
    %v1065 = vadd.f32 %v1060, %v1062
    %v1067 = vsel %vm129, %v1064, 0
    %v1070 = vsel %vm129, %v1065, 0
    %1072 = vmatpush.msra.mxu0 0.0
    %1073 = vmatpush.msra.mxu0 0.0
    %1074 = vmatpush.msra.mxu0 0.0
    %1075 = vmatpush.msra.mxu0 0.0
    %1076 = vmatpush.msra.mxu0 0.0
    %1077 = vmatpush.msra.mxu0 0.0
    %1078 = vmatpush.msra.mxu0 0.0
    %1079 = vmatpush.msra.mxu0 0.0
    %1080 = vmatpush.msra.mxu0 0.0
    %1081 = vmatpush.msra.mxu0 0.0
    %1082 = vmatpush.msra.mxu0 0.0
    %1083 = vmatpush.msra.mxu0 0.0
    %1084 = vmatpush.msra.mxu0 %v990
    %1085 = vmatpush.msra.mxu0 %v988
    %1086 = vmatpush.msra.mxu0 %v986
    %1087 = vmatpush.msra.mxu0 %v984
    %1088 = vmatmul.f32.gmra.mxu0 %v1067
    %v1089 = vpop.f32.mrf.mxu0
    %v1090 = vadd.f32 0.0, %v1089
    %1091 = vmatmul.f32.gmra.mxu0 %v1070
    %v1092 = vpop.f32.mrf.mxu0
    %v1093 = vadd.f32 0.0, %v1092
    %1094 = vdwg.mxu0
    %1095 = vmatpush.msra.mxu0 0.0
    %1096 = vmatpush.msra.mxu0 0.0
    %1097 = vmatpush.msra.mxu0 0.0
    %1098 = vmatpush.msra.mxu0 0.0
    %1099 = vmatpush.msra.mxu0 0.0
    %1100 = vmatpush.msra.mxu0 0.0
    %1101 = vmatpush.msra.mxu0 0.0
    %1102 = vmatpush.msra.mxu0 0.0
    %1103 = vmatpush.msra.mxu0 0.0
    %1104 = vmatpush.msra.mxu0 0.0
    %1105 = vmatpush.msra.mxu0 0.0
    %1106 = vmatpush.msra.mxu0 0.0
    %1107 = vmatpush.msra.mxu0 %v991
    %1108 = vmatpush.msra.mxu0 %v989
    %1109 = vmatpush.msra.mxu0 %v987
    %1110 = vmatpush.msra.mxu0 %v985
    %1111 = vmatmul.f32.gmra.mxu0 %v1067
    %v1112 = vpop.f32.mrf.mxu0
    %v1113 = vadd.f32 0.0, %v1112
    %1114 = vmatmul.f32.gmra.mxu0 %v1070
    %v1115 = vpop.f32.mrf.mxu0
    %v1116 = vadd.f32 0.0, %v1115
    %1117 = vdwg.mxu0
    %v1118 = vmul.f32 %v1090, %v92
    %v1119 = vmul.f32 %v1093, %v93
    %v1120 = vmul.f32 %v1090, %v248
    %v1121 = vmul.f32 %v1093, %v250
    %1124 = vrot.lane.b32.xlu0 %v1120, 32
    %v1125 = vpop.permute.xlu0 %1124
    %1126 = vrot.lane.b32.xlu0 %v1121, 32
    %v1127 = vpop.permute.xlu0 %1126
    %v1130 = vadd.f32 %v1118, %v1125
    %v1131 = vadd.f32 %v1119, %v1127
    %v1132 = vmul.f32 %v1090, %v268
    %v1133 = vmul.f32 %v1093, %v270
    %v1134 = vmul.f32 %v1113, %v94
    %v1135 = vmul.f32 %v1116, %v95
    %1138 = vrot.lane.b32.xlu0 %v1134, 32
    %v1139 = vpop.permute.xlu0 %1138
    %1140 = vrot.lane.b32.xlu0 %v1135, 32
    %v1141 = vpop.permute.xlu0 %1140
    %v1144 = vadd.f32 %v1132, %v1139
    %v1145 = vadd.f32 %v1133, %v1141
    %v1146 = vmul.f32 %v1130, %v287
    %v1147 = vmul.f32 %v1131, %v287
    %v1148 = vmul.f32 %v1090, %v292
    %v1149 = vmul.f32 %v1093, %v292
    %1152 = vrot.lane.b32.xlu0 %v1144, 96
    %v1153 = vpop.permute.xlu0 %1152
    %1154 = vrot.lane.b32.xlu0 %v1145, 96
    %v1155 = vpop.permute.xlu0 %1154
    %v1157 = vsel %vm129, %v1146, 0
    %v1160 = vsel %vm129, %v1147, 0
    %v1162 = vsel %vm129, %v1153, 0
    %v1164 = vsel %vm129, %v1155, 0
    %1166 = vmatpush.xpose.msra.mxu0 0.0
    %1167 = vmatpush.xpose.msra.mxu0 0.0
    %1168 = vmatpush.xpose.msra.mxu0 0.0
    %1169 = vmatpush.xpose.msra.mxu0 0.0
    %1170 = vmatpush.xpose.msra.mxu0 0.0
    %1171 = vmatpush.xpose.msra.mxu0 0.0
    %1172 = vmatpush.xpose.msra.mxu0 0.0
    %1173 = vmatpush.xpose.msra.mxu0 0.0
    %1174 = vmatpush.xpose.msra.mxu0 0.0
    %1175 = vmatpush.xpose.msra.mxu0 0.0
    %1176 = vmatpush.xpose.msra.mxu0 0.0
    %1177 = vmatpush.xpose.msra.mxu0 0.0
    %1178 = vmatpush.xpose.msra.mxu0 0.0
    %1179 = vmatpush.xpose.msra.mxu0 0.0
    %1180 = vmatpush.xpose.msra.mxu0 %v1164
    %1181 = vmatpush.xpose.msra.mxu0 %v1162
    %1182 = vmatmul.f32.gmra.mxu0 %v1157
    %v1183 = vpop.f32.mrf.mxu0
    %v1184 = vadd.f32 0.0, %v1183
    %1185 = vmatmul.f32.gmra.mxu0 %v1160
    %v1186 = vpop.f32.mrf.mxu0
    %v1187 = vadd.f32 0.0, %v1186
    %1188 = vdwg.mxu0
    %v1189 = vmul.f32 %v1184, 0.35355338
    %v1190 = vmul.f32 %v1187, 0.35355338
    %v1191 = vadd.f32 %v1189, %v96
    %v1192 = vadd.f32 %v1190, %v97
    %v1193 = vsel %vm339, %v1191, -inf
    %1194 = vmax.xlane.f32.xlu0 %v1193
    %v1195 = vpop.xlane.xlu0 %1194
    %v1196 = vsel %vm339, %v1192, -inf
    %1197 = vmax.xlane.f32.xlu0 %v1196
    %v1198 = vpop.xlane.xlu0 %1197
    %v1199 = vsub.f32 %v1191, %v1195
    %v1200 = vsub.f32 %v1192, %v1198
    %v1201 = vmul.f32 %v1199, 1.442695
    %v1202 = vpow.pop %v1201
    %v1203 = vmul.f32 %v1200, 1.442695
    %v1204 = vpow.pop %v1203
    %v1205 = vsel %vm339, %v1202, 0.0
    %1206 = vadd.xlane.f32.xlu0 %v1205
    %v1207 = vpop.xlane.xlu0 %1206
    %v1208 = vsel %vm339, %v1204, 0.0
    %1209 = vadd.xlane.f32.xlu0 %v1208
    %v1210 = vpop.xlane.xlu0 %1209
    %v1211 = vrcp.pop %v1207
    %v1212 = vmul.f32 %v1207, %v1211
    %v1213 = vsub.f32 1.0, %v1212
    %v1214 = vmul.f32 %v1211, %v1213
    %v1215 = vadd.f32 %v1211, %v1214
    %vm1216 = vweird.f32 %v1207
    %vm1217 = vweird.f32 %v1211
    %vm1218 = vmor %vm1216, %vm1217
    %v1219 = vsel %vm1218, %v1211, %v1215
    %v1220 = vand.u32 2147483647, %v1207
    %vm1221 = vcmp.eq.f32.partialorder %v1220, 8.507059e+37
    %v1222 = vand.u32 %v1207, 2147483648
    %v1223 = vor.u32 1.1754944e-38, %v1222
    %v1224 = vsel %vm1221, %v1223, %v1219
    %v1225 = vmul.f32 %v1202, %v1224
    %v1226 = vrcp.pop %v1210
    %v1227 = vmul.f32 %v1210, %v1226
    %v1228 = vsub.f32 1.0, %v1227
    %v1229 = vmul.f32 %v1226, %v1228
    %v1230 = vadd.f32 %v1226, %v1229
    %vm1231 = vweird.f32 %v1210
    %vm1232 = vweird.f32 %v1226
    %vm1233 = vmor %vm1231, %vm1232
    %v1234 = vsel %vm1233, %v1226, %v1230
    %v1235 = vand.u32 2147483647, %v1210
    %vm1236 = vcmp.eq.f32.partialorder %v1235, 8.507059e+37
    %v1237 = vand.u32 %v1210, 2147483648
    %v1238 = vor.u32 1.1754944e-38, %v1237
    %v1239 = vsel %vm1236, %v1238, %v1234
    %v1240 = vmul.f32 %v1204, %v1239
    %v1241 = vmul.f32 %v1130, %v388
    %v1242 = vmul.f32 %v1131, %v388
    %v1243 = vmul.f32 %v1090, %v393
    %v1244 = vmul.f32 %v1093, %v393
    %v1246 = vsel %vm129, %v1241, 0
    %v1249 = vsel %vm129, %v1242, 0
    %1251 = vmatpush.xpose.msra.mxu0 0.0
    %1252 = vmatpush.xpose.msra.mxu0 0.0
    %1253 = vmatpush.xpose.msra.mxu0 0.0
    %1254 = vmatpush.xpose.msra.mxu0 0.0
    %1255 = vmatpush.xpose.msra.mxu0 0.0
    %1256 = vmatpush.xpose.msra.mxu0 0.0
    %1257 = vmatpush.xpose.msra.mxu0 0.0
    %1258 = vmatpush.xpose.msra.mxu0 0.0
    %1259 = vmatpush.xpose.msra.mxu0 0.0
    %1260 = vmatpush.xpose.msra.mxu0 0.0
    %1261 = vmatpush.xpose.msra.mxu0 0.0
    %1262 = vmatpush.xpose.msra.mxu0 0.0
    %1263 = vmatpush.xpose.msra.mxu0 0.0
    %1264 = vmatpush.xpose.msra.mxu0 0.0
    %1265 = vmatpush.xpose.msra.mxu0 %v1164
    %1266 = vmatpush.xpose.msra.mxu0 %v1162
    %1267 = vmatmul.f32.gmra.mxu0 %v1246
    %v1268 = vpop.f32.mrf.mxu0
    %v1269 = vadd.f32 0.0, %v1268
    %1270 = vmatmul.f32.gmra.mxu0 %v1249
    %v1271 = vpop.f32.mrf.mxu0
    %v1272 = vadd.f32 0.0, %v1271
    %1273 = vdwg.mxu0
    %v1274 = vmul.f32 %v1269, 0.35355338
    %v1275 = vmul.f32 %v1272, 0.35355338
    %v1276 = vadd.f32 %v1274, %v96
    %v1277 = vadd.f32 %v1275, %v97
    %v1278 = vsel %vm339, %v1276, -inf
    %1279 = vmax.xlane.f32.xlu0 %v1278
    %v1280 = vpop.xlane.xlu0 %1279
    %v1281 = vsel %vm339, %v1277, -inf
    %1282 = vmax.xlane.f32.xlu0 %v1281
    %v1283 = vpop.xlane.xlu0 %1282
    %v1284 = vsub.f32 %v1276, %v1280
    %v1285 = vsub.f32 %v1277, %v1283
    %v1286 = vmul.f32 %v1284, 1.442695
    %v1287 = vpow.pop %v1286
    %v1288 = vmul.f32 %v1285, 1.442695
    %v1289 = vpow.pop %v1288
    %v1290 = vsel %vm339, %v1287, 0.0
    %1291 = vadd.xlane.f32.xlu0 %v1290
    %v1292 = vpop.xlane.xlu0 %1291
    %v1293 = vsel %vm339, %v1289, 0.0
    %1294 = vadd.xlane.f32.xlu0 %v1293
    %v1295 = vpop.xlane.xlu0 %1294
    %v1296 = vrcp.pop %v1292
    %v1297 = vmul.f32 %v1292, %v1296
    %v1298 = vsub.f32 1.0, %v1297
    %v1299 = vmul.f32 %v1296, %v1298
    %v1300 = vadd.f32 %v1296, %v1299
    %vm1301 = vweird.f32 %v1292
    %vm1302 = vweird.f32 %v1296
    %vm1303 = vmor %vm1301, %vm1302
    %v1304 = vsel %vm1303, %v1296, %v1300
    %v1305 = vand.u32 2147483647, %v1292
    %vm1306 = vcmp.eq.f32.partialorder %v1305, 8.507059e+37
    %v1307 = vand.u32 %v1292, 2147483648
    %v1308 = vor.u32 1.1754944e-38, %v1307
    %v1309 = vsel %vm1306, %v1308, %v1304
    %v1310 = vmul.f32 %v1287, %v1309
    %v1311 = vrcp.pop %v1295
    %v1312 = vmul.f32 %v1295, %v1311
    %v1313 = vsub.f32 1.0, %v1312
    %v1314 = vmul.f32 %v1311, %v1313
    %v1315 = vadd.f32 %v1311, %v1314
    %vm1316 = vweird.f32 %v1295
    %vm1317 = vweird.f32 %v1311
    %vm1318 = vmor %vm1316, %vm1317
    %v1319 = vsel %vm1318, %v1311, %v1315
    %v1320 = vand.u32 2147483647, %v1295
    %vm1321 = vcmp.eq.f32.partialorder %v1320, 8.507059e+37
    %v1322 = vand.u32 %v1295, 2147483648
    %v1323 = vor.u32 1.1754944e-38, %v1322
    %v1324 = vsel %vm1321, %v1323, %v1319
    %v1325 = vmul.f32 %v1289, %v1324
    %1328 = vrot.lane.b32.xlu0 %v1243, 64
    %v1329 = vpop.permute.xlu0 %1328
    %1330 = vrot.lane.b32.xlu0 %v1244, 64
    %v1331 = vpop.permute.xlu0 %1330
    %v1335 = vsel %vm339, %v1310, 0
    %v1338 = vsel %vm339, %v1325, 0
    %1340 = vmatpush.msra.mxu0 0.0
    %1341 = vmatpush.msra.mxu0 0.0
    %1342 = vmatpush.msra.mxu0 0.0
    %1343 = vmatpush.msra.mxu0 0.0
    %1344 = vmatpush.msra.mxu0 0.0
    %1345 = vmatpush.msra.mxu0 0.0
    %1346 = vmatpush.msra.mxu0 0.0
    %1347 = vmatpush.msra.mxu0 0.0
    %1348 = vmatpush.msra.mxu0 0.0
    %1349 = vmatpush.msra.mxu0 0.0
    %1350 = vmatpush.msra.mxu0 0.0
    %1351 = vmatpush.msra.mxu0 0.0
    %1352 = vmatpush.msra.mxu0 0.0
    %1353 = vmatpush.msra.mxu0 0.0
    %1354 = vmatpush.msra.mxu0 %v1331
    %1355 = vmatpush.msra.mxu0 %v1329
    %1356 = vmatmul.f32.gmra.mxu0 %v1335
    %v1357 = vpop.f32.mrf.mxu0
    %v1358 = vadd.f32 0.0, %v1357
    %1359 = vmatmul.f32.gmra.mxu0 %v1338
    %v1360 = vpop.f32.mrf.mxu0
    %v1361 = vadd.f32 0.0, %v1360
    %1362 = vdwg.mxu0
    %1365 = vrot.lane.b32.xlu0 %v1148, 64
    %v1366 = vpop.permute.xlu0 %1365
    %1367 = vrot.lane.b32.xlu0 %v1149, 64
    %v1368 = vpop.permute.xlu0 %1367
    %v1372 = vsel %vm339, %v1225, 0
    %v1375 = vsel %vm339, %v1240, 0
    %1377 = vmatpush.msra.mxu0 0.0
    %1378 = vmatpush.msra.mxu0 0.0
    %1379 = vmatpush.msra.mxu0 0.0
    %1380 = vmatpush.msra.mxu0 0.0
    %1381 = vmatpush.msra.mxu0 0.0
    %1382 = vmatpush.msra.mxu0 0.0
    %1383 = vmatpush.msra.mxu0 0.0
    %1384 = vmatpush.msra.mxu0 0.0
    %1385 = vmatpush.msra.mxu0 0.0
    %1386 = vmatpush.msra.mxu0 0.0
    %1387 = vmatpush.msra.mxu0 0.0
    %1388 = vmatpush.msra.mxu0 0.0
    %1389 = vmatpush.msra.mxu0 0.0
    %1390 = vmatpush.msra.mxu0 0.0
    %1391 = vmatpush.msra.mxu0 %v1368
    %1392 = vmatpush.msra.mxu0 %v1366
    %1393 = vmatmul.f32.gmra.mxu0 %v1372
    %v1394 = vpop.f32.mrf.mxu0
    %v1395 = vadd.f32 %v1358, %v1394
    %1396 = vmatmul.f32.gmra.mxu0 %v1375
    %v1397 = vpop.f32.mrf.mxu0
    %v1398 = vadd.f32 %v1361, %v1397
    %1399 = vdwg.mxu0
    %v1400 = vmul.f32 %v1130, %v552
    %v1401 = vmul.f32 %v1131, %v552
    %v1402 = vmul.f32 %v1090, %v557
    %v1403 = vmul.f32 %v1093, %v557
    %v1405 = vsel %vm129, %v1400, 0
    %v1408 = vsel %vm129, %v1401, 0
    %1410 = vmatpush.xpose.msra.mxu0 0.0
    %1411 = vmatpush.xpose.msra.mxu0 0.0
    %1412 = vmatpush.xpose.msra.mxu0 0.0
    %1413 = vmatpush.xpose.msra.mxu0 0.0
    %1414 = vmatpush.xpose.msra.mxu0 0.0
    %1415 = vmatpush.xpose.msra.mxu0 0.0
    %1416 = vmatpush.xpose.msra.mxu0 0.0
    %1417 = vmatpush.xpose.msra.mxu0 0.0
    %1418 = vmatpush.xpose.msra.mxu0 0.0
    %1419 = vmatpush.xpose.msra.mxu0 0.0
    %1420 = vmatpush.xpose.msra.mxu0 0.0
    %1421 = vmatpush.xpose.msra.mxu0 0.0
    %1422 = vmatpush.xpose.msra.mxu0 0.0
    %1423 = vmatpush.xpose.msra.mxu0 0.0
    %1424 = vmatpush.xpose.msra.mxu0 %v1164
    %1425 = vmatpush.xpose.msra.mxu0 %v1162
    %1426 = vmatmul.f32.gmra.mxu0 %v1405
    %v1427 = vpop.f32.mrf.mxu0
    %v1428 = vadd.f32 0.0, %v1427
    %1429 = vmatmul.f32.gmra.mxu0 %v1408
    %v1430 = vpop.f32.mrf.mxu0
    %v1431 = vadd.f32 0.0, %v1430
    %1432 = vdwg.mxu0
    %v1433 = vmul.f32 %v1428, 0.35355338
    %v1434 = vmul.f32 %v1431, 0.35355338
    %v1435 = vadd.f32 %v1433, %v96
    %v1436 = vadd.f32 %v1434, %v97
    %v1437 = vsel %vm339, %v1435, -inf
    %1438 = vmax.xlane.f32.xlu0 %v1437
    %v1439 = vpop.xlane.xlu0 %1438
    %v1440 = vsel %vm339, %v1436, -inf
    %1441 = vmax.xlane.f32.xlu0 %v1440
    %v1442 = vpop.xlane.xlu0 %1441
    %v1443 = vsub.f32 %v1435, %v1439
    %v1444 = vsub.f32 %v1436, %v1442
    %v1445 = vmul.f32 %v1443, 1.442695
    %v1446 = vpow.pop %v1445
    %v1447 = vmul.f32 %v1444, 1.442695
    %v1448 = vpow.pop %v1447
    %v1449 = vsel %vm339, %v1446, 0.0
    %1450 = vadd.xlane.f32.xlu0 %v1449
    %v1451 = vpop.xlane.xlu0 %1450
    %v1452 = vsel %vm339, %v1448, 0.0
    %1453 = vadd.xlane.f32.xlu0 %v1452
    %v1454 = vpop.xlane.xlu0 %1453
    %v1455 = vrcp.pop %v1451
    %v1456 = vmul.f32 %v1451, %v1455
    %v1457 = vsub.f32 1.0, %v1456
    %v1458 = vmul.f32 %v1455, %v1457
    %v1459 = vadd.f32 %v1455, %v1458
    %vm1460 = vweird.f32 %v1451
    %vm1461 = vweird.f32 %v1455
    %vm1462 = vmor %vm1460, %vm1461
    %v1463 = vsel %vm1462, %v1455, %v1459
    %v1464 = vand.u32 2147483647, %v1451
    %vm1465 = vcmp.eq.f32.partialorder %v1464, 8.507059e+37
    %v1466 = vand.u32 %v1451, 2147483648
    %v1467 = vor.u32 1.1754944e-38, %v1466
    %v1468 = vsel %vm1465, %v1467, %v1463
    %v1469 = vmul.f32 %v1446, %v1468
    %v1470 = vrcp.pop %v1454
    %v1471 = vmul.f32 %v1454, %v1470
    %v1472 = vsub.f32 1.0, %v1471
    %v1473 = vmul.f32 %v1470, %v1472
    %v1474 = vadd.f32 %v1470, %v1473
    %vm1475 = vweird.f32 %v1454
    %vm1476 = vweird.f32 %v1470
    %vm1477 = vmor %vm1475, %vm1476
    %v1478 = vsel %vm1477, %v1470, %v1474
    %v1479 = vand.u32 2147483647, %v1454
    %vm1480 = vcmp.eq.f32.partialorder %v1479, 8.507059e+37
    %v1481 = vand.u32 %v1454, 2147483648
    %v1482 = vor.u32 1.1754944e-38, %v1481
    %v1483 = vsel %vm1480, %v1482, %v1478
    %v1484 = vmul.f32 %v1448, %v1483
    %1487 = vrot.lane.b32.xlu0 %v1402, 64
    %v1488 = vpop.permute.xlu0 %1487
    %1489 = vrot.lane.b32.xlu0 %v1403, 64
    %v1490 = vpop.permute.xlu0 %1489
    %v1494 = vsel %vm339, %v1469, 0
    %v1497 = vsel %vm339, %v1484, 0
    %1499 = vmatpush.msra.mxu0 0.0
    %1500 = vmatpush.msra.mxu0 0.0
    %1501 = vmatpush.msra.mxu0 0.0
    %1502 = vmatpush.msra.mxu0 0.0
    %1503 = vmatpush.msra.mxu0 0.0
    %1504 = vmatpush.msra.mxu0 0.0
    %1505 = vmatpush.msra.mxu0 0.0
    %1506 = vmatpush.msra.mxu0 0.0
    %1507 = vmatpush.msra.mxu0 0.0
    %1508 = vmatpush.msra.mxu0 0.0
    %1509 = vmatpush.msra.mxu0 0.0
    %1510 = vmatpush.msra.mxu0 0.0
    %1511 = vmatpush.msra.mxu0 0.0
    %1512 = vmatpush.msra.mxu0 0.0
    %1513 = vmatpush.msra.mxu0 %v1490
    %1514 = vmatpush.msra.mxu0 %v1488
    %1515 = vmatmul.f32.gmra.mxu0 %v1494
    %v1516 = vpop.f32.mrf.mxu0
    %v1517 = vadd.f32 0.0, %v1516
    %1518 = vmatmul.f32.gmra.mxu0 %v1497
    %v1519 = vpop.f32.mrf.mxu0
    %v1520 = vadd.f32 0.0, %v1519
    %1521 = vdwg.mxu0
    %v1522 = vadd.f32 %v1395, %v1517
    %v1523 = vadd.f32 %v1398, %v1520
    %v1524 = vmul.f32 %v1130, %v681
    %v1525 = vmul.f32 %v1131, %v681
    %v1526 = vmul.f32 %v1090, %v686
    %v1527 = vmul.f32 %v1093, %v686
    %v1529 = vsel %vm129, %v1524, 0
    %v1532 = vsel %vm129, %v1525, 0
    %1534 = vmatpush.xpose.msra.mxu0 0.0
    %1535 = vmatpush.xpose.msra.mxu0 0.0
    %1536 = vmatpush.xpose.msra.mxu0 0.0
    %1537 = vmatpush.xpose.msra.mxu0 0.0
    %1538 = vmatpush.xpose.msra.mxu0 0.0
    %1539 = vmatpush.xpose.msra.mxu0 0.0
    %1540 = vmatpush.xpose.msra.mxu0 0.0
    %1541 = vmatpush.xpose.msra.mxu0 0.0
    %1542 = vmatpush.xpose.msra.mxu0 0.0
    %1543 = vmatpush.xpose.msra.mxu0 0.0
    %1544 = vmatpush.xpose.msra.mxu0 0.0
    %1545 = vmatpush.xpose.msra.mxu0 0.0
    %1546 = vmatpush.xpose.msra.mxu0 0.0
    %1547 = vmatpush.xpose.msra.mxu0 0.0
    %1548 = vmatpush.xpose.msra.mxu0 %v1164
    %1549 = vmatpush.xpose.msra.mxu0 %v1162
    %1550 = vmatmul.f32.gmra.mxu0 %v1529
    %v1551 = vpop.f32.mrf.mxu0
    %v1552 = vadd.f32 0.0, %v1551
    %1553 = vmatmul.f32.gmra.mxu0 %v1532
    %v1554 = vpop.f32.mrf.mxu0
    %v1555 = vadd.f32 0.0, %v1554
    %1556 = vdwg.mxu0
    %v1557 = vmul.f32 %v1552, 0.35355338
    %v1558 = vmul.f32 %v1555, 0.35355338
    %v1559 = vadd.f32 %v1557, %v96
    %v1560 = vadd.f32 %v1558, %v97
    %v1561 = vsel %vm339, %v1559, -inf
    %1562 = vmax.xlane.f32.xlu0 %v1561
    %v1563 = vpop.xlane.xlu0 %1562
    %v1564 = vsel %vm339, %v1560, -inf
    %1565 = vmax.xlane.f32.xlu0 %v1564
    %v1566 = vpop.xlane.xlu0 %1565
    %v1567 = vsub.f32 %v1559, %v1563
    %v1568 = vsub.f32 %v1560, %v1566
    %v1569 = vmul.f32 %v1567, 1.442695
    %v1570 = vpow.pop %v1569
    %v1571 = vmul.f32 %v1568, 1.442695
    %v1572 = vpow.pop %v1571
    %v1573 = vsel %vm339, %v1570, 0.0
    %1574 = vadd.xlane.f32.xlu0 %v1573
    %v1575 = vpop.xlane.xlu0 %1574
    %v1576 = vsel %vm339, %v1572, 0.0
    %1577 = vadd.xlane.f32.xlu0 %v1576
    %v1578 = vpop.xlane.xlu0 %1577
    %v1579 = vrcp.pop %v1575
    %v1580 = vmul.f32 %v1575, %v1579
    %v1581 = vsub.f32 1.0, %v1580
    %v1582 = vmul.f32 %v1579, %v1581
    %v1583 = vadd.f32 %v1579, %v1582
    %vm1584 = vweird.f32 %v1575
    %vm1585 = vweird.f32 %v1579
    %vm1586 = vmor %vm1584, %vm1585
    %v1587 = vsel %vm1586, %v1579, %v1583
    %v1588 = vand.u32 2147483647, %v1575
    %vm1589 = vcmp.eq.f32.partialorder %v1588, 8.507059e+37
    %v1590 = vand.u32 %v1575, 2147483648
    %v1591 = vor.u32 1.1754944e-38, %v1590
    %v1592 = vsel %vm1589, %v1591, %v1587
    %v1593 = vmul.f32 %v1570, %v1592
    %v1594 = vrcp.pop %v1578
    %v1595 = vmul.f32 %v1578, %v1594
    %v1596 = vsub.f32 1.0, %v1595
    %v1597 = vmul.f32 %v1594, %v1596
    %v1598 = vadd.f32 %v1594, %v1597
    %vm1599 = vweird.f32 %v1578
    %vm1600 = vweird.f32 %v1594
    %vm1601 = vmor %vm1599, %vm1600
    %v1602 = vsel %vm1601, %v1594, %v1598
    %v1603 = vand.u32 2147483647, %v1578
    %vm1604 = vcmp.eq.f32.partialorder %v1603, 8.507059e+37
    %v1605 = vand.u32 %v1578, 2147483648
    %v1606 = vor.u32 1.1754944e-38, %v1605
    %v1607 = vsel %vm1604, %v1606, %v1602
    %v1608 = vmul.f32 %v1572, %v1607
    %1611 = vrot.lane.b32.xlu0 %v1526, 64
    %v1612 = vpop.permute.xlu0 %1611
    %1613 = vrot.lane.b32.xlu0 %v1527, 64
    %v1614 = vpop.permute.xlu0 %1613
    %v1618 = vsel %vm339, %v1593, 0
    %v1621 = vsel %vm339, %v1608, 0
    %1623 = vmatpush.msra.mxu0 0.0
    %1624 = vmatpush.msra.mxu0 0.0
    %1625 = vmatpush.msra.mxu0 0.0
    %1626 = vmatpush.msra.mxu0 0.0
    %1627 = vmatpush.msra.mxu0 0.0
    %1628 = vmatpush.msra.mxu0 0.0
    %1629 = vmatpush.msra.mxu0 0.0
    %1630 = vmatpush.msra.mxu0 0.0
    %1631 = vmatpush.msra.mxu0 0.0
    %1632 = vmatpush.msra.mxu0 0.0
    %1633 = vmatpush.msra.mxu0 0.0
    %1634 = vmatpush.msra.mxu0 0.0
    %1635 = vmatpush.msra.mxu0 0.0
    %1636 = vmatpush.msra.mxu0 0.0
    %1637 = vmatpush.msra.mxu0 %v1614
    %1638 = vmatpush.msra.mxu0 %v1612
    %1639 = vmatmul.f32.gmra.mxu0 %v1618
    %v1640 = vpop.f32.mrf.mxu0
    %v1641 = vadd.f32 0.0, %v1640
    %1642 = vmatmul.f32.gmra.mxu0 %v1621
    %v1643 = vpop.f32.mrf.mxu0
    %v1644 = vadd.f32 0.0, %v1643
    %1645 = vdwg.mxu0
    %v1646 = vadd.f32 %v1522, %v1641
    %v1647 = vadd.f32 %v1523, %v1644
    %v1649 = vsel %vm129, %v1646, 0
    %v1652 = vsel %vm129, %v1647, 0
    %1654 = vmatpush.msra.mxu0 0.0
    %1655 = vmatpush.msra.mxu0 0.0
    %1656 = vmatpush.msra.mxu0 0.0
    %1657 = vmatpush.msra.mxu0 0.0
    %1658 = vmatpush.msra.mxu0 0.0
    %1659 = vmatpush.msra.mxu0 0.0
    %1660 = vmatpush.msra.mxu0 0.0
    %1661 = vmatpush.msra.mxu0 0.0
    %1662 = vmatpush.msra.mxu0 0.0
    %1663 = vmatpush.msra.mxu0 0.0
    %1664 = vmatpush.msra.mxu0 0.0
    %1665 = vmatpush.msra.mxu0 0.0
    %1666 = vmatpush.msra.mxu0 %v995
    %1667 = vmatpush.msra.mxu0 %v994
    %1668 = vmatpush.msra.mxu0 %v993
    %1669 = vmatpush.msra.mxu0 %v992
    %1670 = vmatmul.f32.gmra.mxu0 %v1649
    %v1671 = vpop.f32.mrf.mxu0
    %v1672 = vadd.f32 0.0, %v1671
    %1673 = vmatmul.f32.gmra.mxu0 %v1652
    %v1674 = vpop.f32.mrf.mxu0
    %v1675 = vadd.f32 0.0, %v1674
    %1676 = vdwg.mxu0
    %v1677 = vadd.f32 %v980, %v1672
    %v1678 = vadd.f32 %v981, %v1675
    %v1679 = vsel %vm129, %v1677, 0.0
    %1680 = vadd.xlane.f32.xlu0 %v1679
    %v1681 = vpop.xlane.xlu0 %1680
    %v1682 = vsel %vm129, %v1678, 0.0
    %1683 = vadd.xlane.f32.xlu0 %v1682
    %v1684 = vpop.xlane.xlu0 %1683
    %v1685 = vmul.f32 %v1681, %v142
    %v1686 = vmul.f32 %v1684, %v142
    %v1687 = vsub.f32 %v1677, %v1685
    %v1688 = vsub.f32 %v1678, %v1686
    %v1689 = vmul.f32 %v1687, %v1687
    %v1690 = vmul.f32 %v1688, %v1688
    %v1691 = vsel %vm129, %v1689, 0.0
    %1692 = vadd.xlane.f32.xlu0 %v1691
    %v1693 = vpop.xlane.xlu0 %1692
    %v1694 = vsel %vm129, %v1690, 0.0
    %1695 = vadd.xlane.f32.xlu0 %v1694
    %v1696 = vpop.xlane.xlu0 %1695
    %v1697 = vmul.f32 %v1693, %v142
    %v1698 = vmul.f32 %v1696, %v142
    %v1699 = vadd.f32 %v1697, 1e-05
    %v1700 = vadd.f32 %v1698, 1e-05
    %v1701 = vrsqrt.pop %v1699
    %v1702 = vmul.f32 %v1701, %v1699
    %v1703 = vmul.f32 %v1702, %v1701
    %v1704 = vmul.f32 0.5, %v1703
    %v1705 = vsub.f32 1.5, %v1704
    %v1706 = vmul.f32 %v1701, %v1705
    %vm1707 = vweird.f32 %v1699
    %vm1708 = vweird.f32 %v1701
    %vm1709 = vmor %vm1707, %vm1708
    %v1710 = vsel %vm1709, %v1701, %v1706
    %v1711 = vrsqrt.pop %v1700
    %v1712 = vmul.f32 %v1711, %v1700
    %v1713 = vmul.f32 %v1712, %v1711
    %v1714 = vmul.f32 0.5, %v1713
    %v1715 = vsub.f32 1.5, %v1714
    %v1716 = vmul.f32 %v1711, %v1715
    %vm1717 = vweird.f32 %v1700
    %vm1718 = vweird.f32 %v1711
    %vm1719 = vmor %vm1717, %vm1718
    %v1720 = vsel %vm1719, %v1711, %v1716
    %v1721 = vmul.f32 %v1687, %v1710
    %v1722 = vmul.f32 %v1688, %v1720
    %v1724 = vperm.slane %v996, 0
    %v1726 = vmul.f32 %v1721, %v1724
    %v1727 = vmul.f32 %v1722, %v1724
    %v1729 = vperm.slane %v997, 0
    %v1731 = vadd.f32 %v1726, %v1729
    %v1732 = vadd.f32 %v1727, %v1729
    %v1734 = vperm.slane %v1002, 0
    %v1737 = vsel %vm129, %v1731, 0
    %v1740 = vsel %vm129, %v1732, 0
    %1742 = vmatpush.msra.mxu0 0.0
    %1743 = vmatpush.msra.mxu0 0.0
    %1744 = vmatpush.msra.mxu0 0.0
    %1745 = vmatpush.msra.mxu0 0.0
    %1746 = vmatpush.msra.mxu0 0.0
    %1747 = vmatpush.msra.mxu0 0.0
    %1748 = vmatpush.msra.mxu0 0.0
    %1749 = vmatpush.msra.mxu0 0.0
    %1750 = vmatpush.msra.mxu0 0.0
    %1751 = vmatpush.msra.mxu0 0.0
    %1752 = vmatpush.msra.mxu0 0.0
    %1753 = vmatpush.msra.mxu0 0.0
    %1754 = vmatpush.msra.mxu0 %v1001
    %1755 = vmatpush.msra.mxu0 %v1000
    %1756 = vmatpush.msra.mxu0 %v999
    %1757 = vmatpush.msra.mxu0 %v998
    %1758 = vmatmul.f32.gmra.mxu0 %v1737
    %v1759 = vpop.f32.mrf.mxu0
    %v1760 = vadd.f32 %v1734, %v1759
    %1761 = vmatmul.f32.gmra.mxu0 %v1740
    %v1762 = vpop.f32.mrf.mxu0
    %v1763 = vadd.f32 %v1734, %v1762
    %1764 = vdwg.mxu0
    %v1765 = vmul.f32 %v1760, %v1760
    %v1766 = vmul.f32 %v1763, %v1763
    %v1767 = vmul.f32 %v1760, %v1765
    %v1768 = vmul.f32 %v1763, %v1766
    %v1769 = vmul.f32 %v1767, 0.044715
    %v1770 = vmul.f32 %v1768, 0.044715
    %v1771 = vadd.f32 %v1760, %v1769
    %v1772 = vadd.f32 %v1763, %v1770
    %v1773 = vmul.f32 %v1771, 0.7978846
    %v1774 = vmul.f32 %v1772, 0.7978846
    %v1775 = vtanh.pop %v1773
    %v1776 = vtanh.pop %v1774
    %v1777 = vadd.f32 %v1775, 1.0
    %v1778 = vadd.f32 %v1776, 1.0
    %v1779 = vmul.f32 %v1777, 0.5
    %v1780 = vmul.f32 %v1778, 0.5
    %v1781 = vmul.f32 %v1760, %v1779
    %v1782 = vmul.f32 %v1763, %v1780
    %v1784 = vsel %vm945, %v1781, 0
    %v1787 = vsel %vm945, %v1782, 0
    %1789 = vmatpush.msra.mxu0 0.0
    %1790 = vmatpush.msra.mxu0 0.0
    %1791 = vmatpush.msra.mxu0 0.0
    %1792 = vmatpush.msra.mxu0 0.0
    %1793 = vmatpush.msra.mxu0 0.0
    %1794 = vmatpush.msra.mxu0 0.0
    %1795 = vmatpush.msra.mxu0 0.0
    %1796 = vmatpush.msra.mxu0 0.0
    %1797 = vmatpush.msra.mxu0 %v1010
    %1798 = vmatpush.msra.mxu0 %v1009
    %1799 = vmatpush.msra.mxu0 %v1008
    %1800 = vmatpush.msra.mxu0 %v1007
    %1801 = vmatpush.msra.mxu0 %v1006
    %1802 = vmatpush.msra.mxu0 %v1005
    %1803 = vmatpush.msra.mxu0 %v1004
    %1804 = vmatpush.msra.mxu0 %v1003
    %1805 = vmatmul.f32.gmra.mxu0 %v1784
    %v1806 = vpop.f32.mrf.mxu0
    %v1807 = vadd.f32 0.0, %v1806
    %1808 = vmatmul.f32.gmra.mxu0 %v1787
    %v1809 = vpop.f32.mrf.mxu0
    %v1810 = vadd.f32 0.0, %v1809
    %1811 = vdwg.mxu0
    %v1812 = vadd.f32 %v1677, %v1807
    %v1813 = vadd.f32 %v1678, %v1810
    %v1815 = vperm.slane %v1011, 0
    %v1817 = vadd.f32 %v1812, %v1815
    %v1818 = vadd.f32 %v1813, %v1815
    %v1819 = vld [vmem:[%s25] sm:$0x1]
    %v1820 = vld [vmem:[%s26] sm:$0x1]
    %v1821 = vld [vmem:[%s27] sm:$0xff]
    %v1822 = vld [vmem:[%s27 + $0x8] sm:$0xff]
    %v1823 = vld [vmem:[%s27 + $0x10] sm:$0xff]
    %v1824 = vld [vmem:[%s27 + $0x18] sm:$0xff]
    %v1825 = vld [vmem:[%s27 + $0x20] sm:$0xff]
    %v1826 = vld [vmem:[%s27 + $0x28] sm:$0xff]
    %v1827 = vld [vmem:[%s27 + $0x30] sm:$0xff]
    %v1828 = vld [vmem:[%s27 + $0x38] sm:$0xff]
    %v1829 = vsel %vm129, %v1817, 0.0
    %1830 = vadd.xlane.f32.xlu0 %v1829
    %v1831 = vpop.xlane.xlu0 %1830
    %v1832 = vsel %vm129, %v1818, 0.0
    %1833 = vadd.xlane.f32.xlu0 %v1832
    %v1834 = vpop.xlane.xlu0 %1833
    %v1835 = vmul.f32 %v1831, %v142
    %v1836 = vmul.f32 %v1834, %v142
    %v1837 = vsub.f32 %v1817, %v1835
    %v1838 = vsub.f32 %v1818, %v1836
    %v1839 = vmul.f32 %v1837, %v1837
    %v1840 = vmul.f32 %v1838, %v1838
    %v1841 = vsel %vm129, %v1839, 0.0
    %1842 = vadd.xlane.f32.xlu0 %v1841
    %v1843 = vpop.xlane.xlu0 %1842
    %v1844 = vsel %vm129, %v1840, 0.0
    %1845 = vadd.xlane.f32.xlu0 %v1844
    %v1846 = vpop.xlane.xlu0 %1845
    %v1847 = vmul.f32 %v1843, %v142
    %v1848 = vmul.f32 %v1846, %v142
    %v1849 = vadd.f32 %v1847, 1e-05
    %v1850 = vadd.f32 %v1848, 1e-05
    %v1851 = vrsqrt.pop %v1849
    %v1852 = vmul.f32 %v1851, %v1849
    %v1853 = vmul.f32 %v1852, %v1851
    %v1854 = vmul.f32 0.5, %v1853
    %v1855 = vsub.f32 1.5, %v1854
    %v1856 = vmul.f32 %v1851, %v1855
    %vm1857 = vweird.f32 %v1849
    %vm1858 = vweird.f32 %v1851
    %vm1859 = vmor %vm1857, %vm1858
    %v1860 = vsel %vm1859, %v1851, %v1856
    %v1861 = vrsqrt.pop %v1850
    %v1862 = vmul.f32 %v1861, %v1850
    %v1863 = vmul.f32 %v1862, %v1861
    %v1864 = vmul.f32 0.5, %v1863
    %v1865 = vsub.f32 1.5, %v1864
    %v1866 = vmul.f32 %v1861, %v1865
    %vm1867 = vweird.f32 %v1850
    %vm1868 = vweird.f32 %v1861
    %vm1869 = vmor %vm1867, %vm1868
    %v1870 = vsel %vm1869, %v1861, %v1866
    %v1871 = vmul.f32 %v1837, %v1860
    %v1872 = vmul.f32 %v1838, %v1870
    %v1874 = vperm.slane %v1819, 0
    %v1876 = vmul.f32 %v1871, %v1874
    %v1877 = vmul.f32 %v1872, %v1874
    %v1879 = vperm.slane %v1820, 0
    %v1881 = vadd.f32 %v1876, %v1879
    %v1882 = vadd.f32 %v1877, %v1879
    %v1884 = vsel %vm129, %v1881, 0
    %v1887 = vsel %vm129, %v1882, 0
    %1889 = vmatpush.msra.mxu0 0.0
    %1890 = vmatpush.msra.mxu0 0.0
    %1891 = vmatpush.msra.mxu0 0.0
    %1892 = vmatpush.msra.mxu0 0.0
    %1893 = vmatpush.msra.mxu0 0.0
    %1894 = vmatpush.msra.mxu0 0.0
    %1895 = vmatpush.msra.mxu0 0.0
    %1896 = vmatpush.msra.mxu0 0.0
    %1897 = vmatpush.msra.mxu0 0.0
    %1898 = vmatpush.msra.mxu0 0.0
    %1899 = vmatpush.msra.mxu0 0.0
    %1900 = vmatpush.msra.mxu0 0.0
    %1901 = vmatpush.msra.mxu0 %v1827
    %1902 = vmatpush.msra.mxu0 %v1825
    %1903 = vmatpush.msra.mxu0 %v1823
    %1904 = vmatpush.msra.mxu0 %v1821
    %1905 = vmatmul.f32.gmra.mxu0 %v1884
    %v1906 = vpop.f32.mrf.mxu0
    %v1907 = vadd.f32 0.0, %v1906
    %1908 = vmatmul.f32.gmra.mxu0 %v1887
    %v1909 = vpop.f32.mrf.mxu0
    %v1910 = vadd.f32 0.0, %v1909
    %1911 = vdwg.mxu0
    %1912 = vmatpush.msra.mxu0 0.0
    %1913 = vmatpush.msra.mxu0 0.0
    %1914 = vmatpush.msra.mxu0 0.0
    %1915 = vmatpush.msra.mxu0 0.0
    %1916 = vmatpush.msra.mxu0 0.0
    %1917 = vmatpush.msra.mxu0 0.0
    %1918 = vmatpush.msra.mxu0 0.0
    %1919 = vmatpush.msra.mxu0 0.0
    %1920 = vmatpush.msra.mxu0 0.0
    %1921 = vmatpush.msra.mxu0 0.0
    %1922 = vmatpush.msra.mxu0 0.0
    %1923 = vmatpush.msra.mxu0 0.0
    %1924 = vmatpush.msra.mxu0 %v1828
    %1925 = vmatpush.msra.mxu0 %v1826
    %1926 = vmatpush.msra.mxu0 %v1824
    %1927 = vmatpush.msra.mxu0 %v1822
    %1928 = vmatmul.f32.gmra.mxu0 %v1884
    %v1929 = vpop.f32.mrf.mxu0
    %v1930 = vadd.f32 0.0, %v1929
    %1931 = vmatmul.f32.gmra.mxu0 %v1887
    %v1932 = vpop.f32.mrf.mxu0
    %v1933 = vadd.f32 0.0, %v1932
    %1934 = vdwg.mxu0
    %1935 = vst [vmem:[#allocation2] sm:$0xff] %v1907
    %1936 = vst [vmem:[#allocation2 + $0x8] sm:$0xff] %v1930
    %1937 = vst [vmem:[#allocation2 + $0x10] sm:$0xff] %v1910
    %1938 = vst [vmem:[#allocation2 + $0x18] sm:$0xff] %v1933
    // Predicated region
    $region114: #{msingi1_forward.1} parent=1 // pred_check
      _
    $region115: #{msingi1_forward.1} parent=1 // pred_check_branch
      %1940 = sbr.rel (0) target = $region117
    $region116: #{msingi1_forward.1} parent=1 // pred_region
      %1942 = vsyncadd [#allocation3], 0
      %s1943 = sshll.u32 [#allocation2], 4
      %s1944 = int_to_ptr.vmem [resolvable:$true] %s1943
      %s1945 = sshll.u32 %s28, 4
      %s1946 = int_to_ptr.hbm [resolvable:$true] %s1945
      %1951 = dma.vmem_to_hbm [thread:$0]  %s1944, 512, %s1946, [#allocation3], 256, 256, 16
    $region117: #{msingi1_forward.1} parent=1 // pred_fallthru
      _
    // Predicated region
    $region118: #{msingi1_forward.1} parent=1 // pred_check
      _
    $region119: #{msingi1_forward.1} parent=1 // pred_check_branch
      %1953 = sbr.rel (0) target = $region121
    $region120: #{msingi1_forward.1} parent=1 // pred_region
      %1955 = dma.done [#allocation3], 512
    $region121: #{msingi1_forward.1} parent=1 // pred_fallthru
      _
    %1956 = vsyncpa [#allocation3], 1

</llo_original>
